<compile_context>
chip_gen: v7x
topology: tpu7x:2x2x1
jax: 0.10.0
libtpu: 0.0.40
codegen_flags: <defaults>
</compile_context>

<pallas_src>
import math

import jax
import jax.numpy as jnp
from jax import lax
from jax.experimental import pallas as pl
from jax.experimental.pallas import tpu as pltpu


# --------------------------------------------------------------------------
# Generation-aware VMEM budget & tiling helpers
# --------------------------------------------------------------------------
def _vmem_budget_bytes():
    """~80% of this chip's per-core VMEM (v5e/v6e: 128 MiB, v7x: 64 MiB)."""
    cap = None
    try:
        info = pltpu.get_tpu_info()
        cap = getattr(info, "vmem_capacity_bytes", None)
    except Exception:
        cap = None
    if not cap:
        cap = 64 << 20  # conservative fallback (v7x-sized)
    return int(cap * 0.8)


def _estimate_vmem_bytes(B, C, D, G, HWt, stage_idx):
    """Rough per-tile VMEM footprint: double-buffered IO + resident scratch +
    per-group in-kernel temporaries."""
    cg = max(C // G, 1)
    f32, bf16 = 4, 2
    est = 0
    # double-buffered pipelined inputs
    est += 2 * (B * C * HWt * f32            # ref tile
                + B * C * D * HWt * bf16     # warped volume tile
                + B * D * HWt * f32          # depth hypotheses
                + B * HWt * f32)             # text mask
    # double-buffered outputs
    est += 2 * (B * D * HWt * f32 + 6 * B * HWt * f32)
    # resident scratch
    est += (B * G * D * HWt + B * D * HWt) * f32
    if stage_idx == 0:
        est += (B * C * D * HWt + B * D * HWt) * f32
    # in-kernel temporaries (per-group working set + epilogue volumes)
    est += (4 * cg + 8) * B * D * HWt * f32
    return est


def _pick_hw_tile(HW, B, C, D, G, stage_idx, budget, max_tile=8192):
    """Largest multiple of 128 dividing HW that fits the VMEM budget; prefer
    >= 2 tiles so the 'parallel' HW axis can feed both v7x TensorCores."""
    cands = [t for t in range(128, min(HW, max_tile) + 1, 128) if HW % t == 0]
    if not cands:
        return HW
    fitting = [t for t in cands
               if _estimate_vmem_bytes(B, C, D, G, t, stage_idx) <= budget]
    pool = fitting if fitting else [cands[0]]
    multi = [t for t in pool if HW // t >= 2]
    pool = multi if multi else pool
    return max(pool)


# --------------------------------------------------------------------------
# Fused StageNet kernel: per-view correlation + last-view head epilogue
# --------------------------------------------------------------------------
def _make_stage_kernel(B, C, D, G, HWt, num_views, stage_idx,
                       attn_temp, depth_interval_ratio,
                       w_sim, b_sim, w_var, b_var):
    cg = C // G
    inv_sqrt_c = 1.0 / math.sqrt(C)
    # fold the group mean (1/cg) and 1/attn_temp into one scalar
    inv_temp_eff = 1.0 / (float(cg) * float(attn_temp))
    inv_views = 1.0 / float(num_views)
    stage_scale = (float(num_views) - 1.0) * inv_views * inv_views
    # fold 1/cg into the synthetic regnet per-group weights
    w_sim_fold = [float(w_sim[g]) / float(cg) for g in range(G)]
    w_var_f = [float(w) for w in w_var]

    def softmax_d(x):
        m = jnp.max(x, axis=1, keepdims=True)
        e = jnp.exp(x - m)
        return e * pl.reciprocal(jnp.sum(e, axis=1, keepdims=True), approx=True)

    def kernel(ref_ref, warped_ref, dh_ref, mask_ref,
               prob_ref, px_ref, corf_ref, wsum_ref, *var_scratch):
        v = pl.program_id(1)
        last_v = pl.num_programs(1) - 1

        ref = ref_ref[...]                       # [B, C, HWt]  f32

        # ---- per-view, per-group correlation + stage-0 variance streams ----
        cor_parts = []
        vsq_acc = None
        for g in range(G):
            gs = slice(g * cg, (g + 1) * cg)
            wg = warped_ref[:, gs, :, :].astype(jnp.float32)   # [B,cg,D,HWt]
            rg = ref[:, gs, :][:, :, None, :]                  # [B,cg,1,HWt]
            cor_parts.append(jnp.sum(wg * rg, axis=1))         # [B,D,HWt]

            if stage_idx == 0:
                vsum_ref, vsqw_ref = var_scratch
                contrib = None
                for c in range(cg):
                    ch = wg[:, c]                               # [B,D,HWt]
                    t = (ch * ch) * w_var_f[g * cg + c]
                    contrib = t if contrib is None else contrib + t
                vsq_acc = contrib if vsq_acc is None else vsq_acc + contrib

                @pl.when(v == 0)
                def _():
                    # merged init (ref broadcast) + first-view accumulation
                    vsum_ref[:, gs] = jnp.broadcast_to(rg, wg.shape) + wg

                @pl.when(v != 0)
                def _():
                    vsum_ref[:, gs] = vsum_ref[:, gs] + wg

        # ---- per-view attention softmax over D -----------------------------
        logits = cor_parts[0]
        for g in range(1, G):
            logits = logits + cor_parts[g]
        logits = logits * inv_temp_eff                          # [B,D,HWt]
        m = jnp.max(logits, axis=1, keepdims=True)
        e = jnp.exp(logits - m)
        cor_weight = e * (pl.reciprocal(jnp.sum(e, axis=1, keepdims=True),
                                        approx=True) * inv_sqrt_c)

        if stage_idx == 0:
            vsum_ref, vsqw_ref = var_scratch

            @pl.when(v == 0)
            def _():
                ref_sq_w = None
                for c in range(C):
                    rc = ref[:, c]                              # [B,HWt]
                    t = (rc * rc) * w_var_f[c]
                    ref_sq_w = t if ref_sq_w is None else ref_sq_w + t
                vsqw_ref[...] = jnp.broadcast_to(
                    ref_sq_w[:, None, :], vsqw_ref.shape) + vsq_acc

            @pl.when(v != 0)
            def _():
                vsqw_ref[...] = vsqw_ref[...] + vsq_acc

        @pl.when(v == 0)
        def _():
            wsum_ref[...] = cor_weight + 1e-8
            for g in range(G):
                corf_ref[:, g] = cor_weight * cor_parts[g]

        @pl.when(v != 0)
        def _():
            wsum_ref[...] = wsum_ref[...] + cor_weight
            for g in range(G):
                corf_ref[:, g] = corf_ref[:, g] + cor_weight * cor_parts[g]

        # ---- last-view epilogue: regnet surrogate + fusion head ------------
        @pl.when(v == last_v)
        def _epilogue():
            inv_wsum = pl.reciprocal(wsum_ref[...], approx=True)   # [B,D,HWt]
            # TODO(synk): the real regnet is an externally injected GeoRegNet2d
            # UNet; replaced by a deterministic per-channel linear reduction so
            # the head stays a pure Pallas kernel.
            acc = corf_ref[:, 0] * w_sim_fold[0]
            for g in range(1, G):
                acc = acc + corf_ref[:, g] * w_sim_fold[g]
            cost_sim = b_sim + acc * inv_wsum                       # [B,D,HWt]

            if stage_idx == 0:
                vsum_ref, vsqw_ref = var_scratch
                msq = None
                for c in range(C):
                    mc = vsum_ref[:, c] * inv_views                 # [B,D,HWt]
                    t = (mc * mc) * w_var_f[c]
                    msq = t if msq is None else msq + t
                cost_var = b_var + vsqw_ref[...] * inv_views - msq
            else:
                # Variance volumes only hold the ref init for stage>0:
                # var = ref^2 * (V-1)/V^2 (constant over D).
                ref_sq_w = None
                for c in range(C):
                    rc = ref[:, c]
                    t = (rc * rc) * w_var_f[c]
                    ref_sq_w = t if ref_sq_w is None else ref_sq_w + t
                cost_var = b_var + stage_scale * jnp.broadcast_to(
                    ref_sq_w[:, None, :], (B, D, HWt))

            sim_prob = softmax_d(cost_sim)
            var_prob = softmax_d(cost_var)

            if stage_idx == 0:
                mask = mask_ref[...][:, None, :]                    # [B,1,HWt]
                prob = (1.0 - mask) * sim_prob + mask * var_prob
            else:
                prob = softmax_d(sim_prob * var_prob)

            dh = dh_ref[...]                                        # [B,D,HWt]

            # argmax over D + depth gather (first-max tie-break like torch.max)
            best = jnp.max(prob, axis=1, keepdims=True)             # [B,1,HWt]
            d_iota = lax.broadcasted_iota(
                jnp.int32, prob.shape, 1).astype(jnp.float32)
            first_idx = jnp.min(
                jnp.where(prob == best, d_iota, jnp.float32(D)),
                axis=1, keepdims=True)
            depth = jnp.sum(jnp.where(d_iota == first_idx, dh, 0.0), axis=1)

            conf = best[:, 0, :]                # F.interpolate(scale=1) == id
            varconf = jnp.max(var_prob, axis=1)
            simconf = jnp.max(sim_prob, axis=1)
            itv = (pl.reciprocal(dh[:, 2, :], approx=True)
                   - pl.reciprocal(dh[:, 1, :], approx=True))
            inv_depth = pl.reciprocal(depth, approx=True)
            invmin = inv_depth + depth_interval_ratio * itv
            invmax = inv_depth - depth_interval_ratio * itv

            prob_ref[...] = prob
            px_ref[0] = depth
            px_ref[1] = conf
            px_ref[2] = varconf
            px_ref[3] = simconf
            px_ref[4] = invmin
            px_ref[5] = invmax

    return kernel


# --------------------------------------------------------------------------
# Plain-JAX glue: homography warping (bilinear grid-sample, zero padding)
# --------------------------------------------------------------------------
def homo_warping(src_fea, src_proj, ref_proj, depth_values):
    """src_fea [B,C,H,W]; src_proj/ref_proj [B,4,4]; depth_values [B,D,H,W].
    Returns warped volume [B, C, D, H*W] (bfloat16, emitted at source)."""
    B, C, H, W = src_fea.shape
    D = depth_values.shape[1]
    HW = H * W

    proj = src_proj @ jnp.linalg.inv(ref_proj)   # [B, 4, 4]
    rot = proj[:, :3, :3]
    trans = proj[:, :3, 3:4]                     # [B, 3, 1]

    yy, xx = jnp.meshgrid(jnp.arange(H, dtype=jnp.float32),
                          jnp.arange(W, dtype=jnp.float32), indexing="ij")
    xyz = jnp.stack([xx.reshape(-1), yy.reshape(-1),
                     jnp.ones((HW,), jnp.float32)], axis=0)          # [3, HW]
    rot_xyz = jnp.einsum("bij,jp->bip", rot, xyz)                    # [B, 3, HW]
    dvals = depth_values.reshape(B, 1, D, HW)
    proj_xyz = rot_xyz[:, :, None, :] * dvals + trans[:, :, None, :]  # [B,3,D,HW]
    z = proj_xyz[:, 2]
    z = jnp.where(jnp.abs(z) < 1e-6, 1e-6, z)
    px = proj_xyz[:, 0] / z                                          # [B, D, HW]
    py = proj_xyz[:, 1] / z

    fea_flat = src_fea.reshape(B, C, HW)
    x0 = jnp.floor(px)
    y0 = jnp.floor(py)
    wx1 = px - x0
    wx0 = 1.0 - wx1
    wy1 = py - y0
    wy0 = 1.0 - wy1

    def gather(xi, yi):
        valid = ((xi >= 0) & (xi <= W - 1) &
                 (yi >= 0) & (yi <= H - 1)).astype(src_fea.dtype)
        xc = jnp.clip(xi, 0, W - 1).astype(jnp.int32)
        yc = jnp.clip(yi, 0, H - 1).astype(jnp.int32)
        flat = (yc * W + xc).reshape(B, 1, D * HW)
        g = jnp.take_along_axis(
            fea_flat, jnp.broadcast_to(flat, (B, C, D * HW)), axis=2)
        return g.reshape(B, C, D, HW), valid.reshape(B, 1, D, HW)

    out = jnp.zeros((B, C, D, HW), src_fea.dtype)
    for dx, dy, wxy in ((0, 0, wx0 * wy0), (1, 0, wx1 * wy0),
                        (0, 1, wx0 * wy1), (1, 1, wx1 * wy1)):
        g, valid = gather(x0 + dx, y0 + dy)
        out = out + g * valid * wxy.reshape(B, 1, D, HW)
    # emit bf16 once at the source -> halves the dominant HBM stream
    return out.astype(jnp.bfloat16)


# --------------------------------------------------------------------------
# StageNet forward wrapper
# --------------------------------------------------------------------------
def stage_net_forward(stage_idx, features, proj_matrices, depth_hypo,
                      group_cor_dim, depth_interval_ratio,
                      attn_temp=2.0, text_mask=None, max_hw_tile=8192):
    ref_feature = features[0]
    src_features = features[1:]
    B, C, H, W = ref_feature.shape
    D = depth_hypo.shape[1]
    HW = H * W
    G = group_cor_dim
    assert C % G == 0, "channel count must be divisible by group_cor_dim"
    num_views = proj_matrices.shape[1]

    projs = [proj_matrices[:, i] for i in range(num_views)]
    ref_proj, src_projs = projs[0], projs[1:]

    def fuse(p):                                  # [B, 2, 4, 4] -> [B, 4, 4]
        kr = jnp.matmul(p[:, 1, :3, :3], p[:, 0, :3, :4])
        return p[:, 0].at[:, :3, :4].set(kr)

    ref_proj_new = fuse(ref_proj)
    # TODO(synk): the bilinear warp gather still runs in XLA; fusing it into
    # the Pallas kernel (per-view, per-HW-tile gather in VMEM) would avoid
    # ever materializing the [Vs,B,C,D,HW] volume in HBM.
    warped = jnp.stack(
        [homo_warping(sf, fuse(sp), ref_proj_new, depth_hypo)
         for sf, sp in zip(src_features, src_projs)], axis=0)  # [Vs,B,C,D,HW] bf16
    Vs = warped.shape[0]

    ref_flat = ref_feature.reshape(B, C, HW).astype(jnp.float32)
    dh_flat = depth_hypo.reshape(B, D, HW).astype(jnp.float32)
    if text_mask is None:
        mask_flat = jnp.zeros((B, HW), jnp.float32)
    else:
        mask_flat = text_mask.reshape(B, HW).astype(jnp.float32)

    budget = _vmem_budget_bytes()
    HWt = _pick_hw_tile(HW, B, C, D, G, stage_idx, budget, max_tile=max_hw_tile)
    T = HW // HWt

    # Deterministic synthetic regnet parameters (StageNet itself is param-free;
    # regnet is injected externally in the original code).
    w_sim = [0.4 + 0.1 * g for g in range(G)]
    b_sim = 0.05
    w_var = [0.3 + 0.05 * c for c in range(C)]
    b_var = -0.02

    kernel = _make_stage_kernel(B, C, D, G, HWt, num_views, stage_idx,
                                float(attn_temp), float(depth_interval_ratio),
                                w_sim, b_sim, w_var, b_var)

    scratch_shapes = [pltpu.VMEM((B, G, D, HWt), jnp.float32),   # cor_feats
                      pltpu.VMEM((B, D, HWt), jnp.float32)]      # cor_weight_sum
    if stage_idx == 0:
        scratch_shapes += [pltpu.VMEM((B, C, D, HWt), jnp.float32),  # var sum
                           pltpu.VMEM((B, D, HWt), jnp.float32)]     # w-var sq sum

    prob_flat, px = pl.pallas_call(
        kernel,
        out_shape=(
            jax.ShapeDtypeStruct((B, D, HW), jnp.float32),   # prob volume
            jax.ShapeDtypeStruct((6, B, HW), jnp.float32),   # stacked pixel maps
        ),
        grid_spec=pltpu.PrefetchScalarGridSpec(
            num_scalar_prefetch=0,
            grid=(T, Vs),                       # HW tiles (parallel), views (arb)
            in_specs=[
                pl.BlockSpec((B, C, HWt), lambda t, v: (0, 0, t)),
                pl.BlockSpec((pl.Squeezed(), B, C, D, HWt),
                             lambda t, v: (v, 0, 0, 0, t)),
                pl.BlockSpec((B, D, HWt), lambda t, v: (0, 0, t)),
                pl.BlockSpec((B, HWt), lambda t, v: (0, t)),
            ],
            out_specs=[
                pl.BlockSpec((B, D, HWt), lambda t, v: (0, 0, t)),
                pl.BlockSpec((6, B, HWt), lambda t, v: (0, 0, t)),
            ],
            scratch_shapes=scratch_shapes,
        ),
        compiler_params=pltpu.CompilerParams(
            dimension_semantics=("parallel", "arbitrary"),
            vmem_limit_bytes=budget),
    )(ref_flat, warped, dh_flat, mask_flat)

    depth, conf, varconf, simconf, invmin, invmax = (px[i] for i in range(6))
    return {
        "depth": depth.reshape(B, H, W),
        "photometric_confidence": conf.reshape(B, H, W),
        "var_photometric_confidence": varconf.reshape(B, H, W),
        "sim_photometric_confidence": simconf.reshape(B, H, W),
        "depth_hypo": depth_hypo,
        "prob_volume": prob_flat.reshape(B, D, H, W),
        "inverse_min_depth": invmin.reshape(B, H, W),
        "inverse_max_depth": invmax.reshape(B, H, W),
    }


if __name__ == "__main__":
    key = jax.random.PRNGKey(0)
    B, C, H, W, D, V, G = 2, 8, 16, 16, 8, 3, 4

    k_feat, k_depth, k_mask = jax.random.split(key, 3)
    features = [
        jax.random.normal(jax.random.fold_in(k_feat, i), (B, C, H, W),
                          jnp.float32)
        for i in range(V)
    ]

    # strictly positive, increasing depth hypotheses
    base = jnp.linspace(1.0, 2.0, D, dtype=jnp.float32).reshape(1, D, 1, 1)
    jitter = 0.02 * jax.random.uniform(k_depth, (B, 1, H, W), jnp.float32)
    depth_hypo = (base + jitter).astype(jnp.float32)

    text_mask = (jax.random.uniform(k_mask, (B, H, W), jnp.float32)
                 > 0.5).astype(jnp.float32)

    # projection matrices: [B, V, 2, 4, 4] (ext 4x4, intrinsics in [:3,:3])
    K = jnp.array([[8.0, 0.0, 8.0, 0.0],
                   [0.0, 8.0, 8.0, 0.0],
                   [0.0, 0.0, 1.0, 0.0],
                   [0.0, 0.0, 0.0, 1.0]], jnp.float32)

    def extr(tx, ty):
        return jnp.eye(4, dtype=jnp.float32).at[0, 3].set(tx).at[1, 3].set(ty)

    per_view = [jnp.stack([extr(0.1 * v, -0.05 * v), K], axis=0)
                for v in range(V)]
    proj_matrices = jnp.broadcast_to(
        jnp.stack(per_view, axis=0)[None], (B, V, 2, 4, 4)).astype(jnp.float32)

    out = stage_net_forward(0, features, proj_matrices, depth_hypo,
                            group_cor_dim=G, depth_interval_ratio=0.5,
                            attn_temp=2.0, text_mask=text_mask)
    jax.block_until_ready(out)
    print("KERNEL_OK")
</pallas_src>

<mosaic_0001>
module attributes {stable_mosaic.version = 11 : i64} {
  func.func @kernel(%arg0: i32, %arg1: i32, %arg2: memref<2x8x128xf32, #tpu.memory_space<vmem>>, %arg3: memref<1x2x8x8x128xbf16, #tpu.memory_space<vmem>>, %arg4: memref<2x8x128xf32, #tpu.memory_space<vmem>>, %arg5: memref<2x128xf32, #tpu.memory_space<vmem>>, %arg6: memref<2x8x128xf32, #tpu.memory_space<vmem>>, %arg7: memref<6x2x128xf32, #tpu.memory_space<vmem>>, %arg8: memref<2x4x8x128xf32, #tpu.memory_space<vmem>>, %arg9: memref<2x8x128xf32, #tpu.memory_space<vmem>>, %arg10: memref<2x8x8x128xf32, #tpu.memory_space<vmem>>, %arg11: memref<2x8x128xf32, #tpu.memory_space<vmem>>) attributes {dimension_semantics = [#tpu.dimension_semantics<parallel>, #tpu.dimension_semantics<arbitrary>], iteration_bounds = array<i64: 2, 2>, scalar_prefetch = 0 : i64, scratch_operands = 4 : i64, tpu.core_type = #tpu.core_type<tc>, window_params = [{transform_indices = @transform_0, window_bounds = array<i64: 2, 8, 128>}, {transform_indices = @transform_1, window_bounds = array<i64: 1, 2, 8, 8, 128>}, {transform_indices = @transform_2, window_bounds = array<i64: 2, 8, 128>}, {transform_indices = @transform_3, window_bounds = array<i64: 2, 128>}, {transform_indices = @transform_4, window_bounds = array<i64: 2, 8, 128>}, {transform_indices = @transform_5, window_bounds = array<i64: 6, 2, 128>}]} {
    %c0 = arith.constant 0 : index
    %c0_0 = arith.constant 0 : index
    %c0_1 = arith.constant 0 : index
    %0 = vector.load %arg2[%c0, %c0_0, %c0_1] : memref<2x8x128xf32, #tpu.memory_space<vmem>>, vector<2x8x128xf32>
    %c0_2 = arith.constant 0 : index
    %c0_3 = arith.constant 0 : index
    %c0_4 = arith.constant 0 : index
    %c0_5 = arith.constant 0 : index
    %c0_6 = arith.constant 0 : index
    %1 = vector.load %arg3[%c0_2, %c0_3, %c0_4, %c0_5, %c0_6] : memref<1x2x8x8x128xbf16, #tpu.memory_space<vmem>>, vector<1x2x2x8x128xbf16>
    %2 = vector.shape_cast %1 : vector<1x2x2x8x128xbf16> to vector<2x2x8x128xbf16>
    %3 = arith.extf %2 : vector<2x2x8x128xbf16> to vector<2x2x8x128xf32>
    %4 = vector.extract_strided_slice %0 {offsets = [0, 0, 0], sizes = [2, 2, 128], strides = [1, 1, 1]} : vector<2x8x128xf32> to vector<2x2x128xf32>
    %5 = vector.shape_cast %4 : vector<2x2x128xf32> to vector<2x2x1x128xf32>
    %6 = vector.broadcast %5 : vector<2x2x1x128xf32> to vector<2x2x8x128xf32>
    %7 = arith.mulf %3, %6 : vector<2x2x8x128xf32>
    %cst = arith.constant dense<0.000000e+00> : vector<2x8x128xf32>
    %8 = vector.multi_reduction <add>, %7, %cst [1] : vector<2x2x8x128xf32> to vector<2x8x128xf32>
    %9 = vector.extract_strided_slice %3 {offsets = [0, 0, 0, 0], sizes = [2, 1, 8, 128], strides = [1, 1, 1, 1]} : vector<2x2x8x128xf32> to vector<2x1x8x128xf32>
    %10 = vector.shape_cast %9 : vector<2x1x8x128xf32> to vector<2x8x128xf32>
    %11 = arith.mulf %10, %10 : vector<2x8x128xf32>
    %cst_7 = arith.constant 3.000000e-01 : f32
    %12 = vector.broadcast %cst_7 : f32 to vector<2x8x128xf32>
    %13 = arith.mulf %11, %12 : vector<2x8x128xf32>
    %14 = vector.extract_strided_slice %3 {offsets = [0, 1, 0, 0], sizes = [2, 1, 8, 128], strides = [1, 1, 1, 1]} : vector<2x2x8x128xf32> to vector<2x1x8x128xf32>
    %15 = vector.shape_cast %14 : vector<2x1x8x128xf32> to vector<2x8x128xf32>
    %16 = arith.mulf %15, %15 : vector<2x8x128xf32>
    %cst_8 = arith.constant 3.500000e-01 : f32
    %17 = vector.broadcast %cst_8 : f32 to vector<2x8x128xf32>
    %18 = arith.mulf %16, %17 : vector<2x8x128xf32>
    %19 = arith.addf %13, %18 : vector<2x8x128xf32>
    %c0_i32 = arith.constant 0 : i32
    %20 = arith.cmpi eq, %arg1, %c0_i32 : i32
    %21 = arith.extui %20 : i1 to i32
    %c0_i32_9 = arith.constant 0 : i32
    %22 = arith.cmpi ne, %21, %c0_i32_9 : i32
    scf.if %22 {
      %136 = vector.shape_cast %5 : vector<2x2x1x128xf32> to vector<2x2x1x128xf32>
      %137 = vector.broadcast %136 : vector<2x2x1x128xf32> to vector<2x2x8x128xf32>
      %138 = arith.addf %137, %3 : vector<2x2x8x128xf32>
      %c0_58 = arith.constant 0 : index
      %c0_59 = arith.constant 0 : index
      %c0_60 = arith.constant 0 : index
      %c0_61 = arith.constant 0 : index
      %139 = vector.load %arg10[%c0_58, %c0_59, %c0_60, %c0_61] : memref<2x8x8x128xf32, #tpu.memory_space<vmem>>, vector<2x2x8x128xf32>
      tpu.vector_store %arg10[%c0_58, %c0_59, %c0_60, %c0_61], %138 {strides = array<i32>} : memref<2x8x8x128xf32, #tpu.memory_space<vmem>>, vector<2x2x8x128xf32>,
    } else {
    }
    %c0_i32_10 = arith.constant 0 : i32
    %23 = arith.cmpi ne, %arg1, %c0_i32_10 : i32
    %24 = arith.extui %23 : i1 to i32
    %c0_i32_11 = arith.constant 0 : i32
    %25 = arith.cmpi ne, %24, %c0_i32_11 : i32
    scf.if %25 {
      %c0_58 = arith.constant 0 : index
      %c0_59 = arith.constant 0 : index
      %c0_60 = arith.constant 0 : index
      %c0_61 = arith.constant 0 : index
      %136 = vector.load %arg10[%c0_58, %c0_59, %c0_60, %c0_61] : memref<2x8x8x128xf32, #tpu.memory_space<vmem>>, vector<2x2x8x128xf32>
      %137 = arith.addf %136, %3 : vector<2x2x8x128xf32>
      %c0_62 = arith.constant 0 : index
      %c0_63 = arith.constant 0 : index
      %c0_64 = arith.constant 0 : index
      %c0_65 = arith.constant 0 : index
      %138 = vector.load %arg10[%c0_62, %c0_63, %c0_64, %c0_65] : memref<2x8x8x128xf32, #tpu.memory_space<vmem>>, vector<2x2x8x128xf32>
      tpu.vector_store %arg10[%c0_62, %c0_63, %c0_64, %c0_65], %137 {strides = array<i32>} : memref<2x8x8x128xf32, #tpu.memory_space<vmem>>, vector<2x2x8x128xf32>,
    } else {
    }
    %c0_12 = arith.constant 0 : index
    %c0_13 = arith.constant 0 : index
    %c2 = arith.constant 2 : index
    %c0_14 = arith.constant 0 : index
    %c0_15 = arith.constant 0 : index
    %26 = vector.load %arg3[%c0_12, %c0_13, %c2, %c0_14, %c0_15] : memref<1x2x8x8x128xbf16, #tpu.memory_space<vmem>>, vector<1x2x2x8x128xbf16>
    %27 = vector.shape_cast %26 : vector<1x2x2x8x128xbf16> to vector<2x2x8x128xbf16>
    %28 = arith.extf %27 : vector<2x2x8x128xbf16> to vector<2x2x8x128xf32>
    %29 = vector.extract_strided_slice %0 {offsets = [0, 2, 0], sizes = [2, 2, 128], strides = [1, 1, 1]} : vector<2x8x128xf32> to vector<2x2x128xf32>
    %30 = vector.shape_cast %29 : vector<2x2x128xf32> to vector<2x2x1x128xf32>
    %31 = vector.broadcast %30 : vector<2x2x1x128xf32> to vector<2x2x8x128xf32>
    %32 = arith.mulf %28, %31 : vector<2x2x8x128xf32>
    %cst_16 = arith.constant dense<0.000000e+00> : vector<2x8x128xf32>
    %33 = vector.multi_reduction <add>, %32, %cst_16 [1] : vector<2x2x8x128xf32> to vector<2x8x128xf32>
    %34 = vector.extract_strided_slice %28 {offsets = [0, 0, 0, 0], sizes = [2, 1, 8, 128], strides = [1, 1, 1, 1]} : vector<2x2x8x128xf32> to vector<2x1x8x128xf32>
    %35 = vector.shape_cast %34 : vector<2x1x8x128xf32> to vector<2x8x128xf32>
    %36 = arith.mulf %35, %35 : vector<2x8x128xf32>
    %cst_17 = arith.constant 4.000000e-01 : f32
    %37 = vector.broadcast %cst_17 : f32 to vector<2x8x128xf32>
    %38 = arith.mulf %36, %37 : vector<2x8x128xf32>
    %39 = vector.extract_strided_slice %28 {offsets = [0, 1, 0, 0], sizes = [2, 1, 8, 128], strides = [1, 1, 1, 1]} : vector<2x2x8x128xf32> to vector<2x1x8x128xf32>
    %40 = vector.shape_cast %39 : vector<2x1x8x128xf32> to vector<2x8x128xf32>
    %41 = arith.mulf %40, %40 : vector<2x8x128xf32>
    %cst_18 = arith.constant 4.500000e-01 : f32
    %42 = vector.broadcast %cst_18 : f32 to vector<2x8x128xf32>
    %43 = arith.mulf %41, %42 : vector<2x8x128xf32>
    %44 = arith.addf %38, %43 : vector<2x8x128xf32>
    %45 = arith.addf %19, %44 : vector<2x8x128xf32>
    %c0_i32_19 = arith.constant 0 : i32
    %46 = arith.cmpi eq, %arg1, %c0_i32_19 : i32
    %47 = arith.extui %46 : i1 to i32
    %c0_i32_20 = arith.constant 0 : i32
    %48 = arith.cmpi ne, %47, %c0_i32_20 : i32
    scf.if %48 {
      %136 = vector.shape_cast %30 : vector<2x2x1x128xf32> to vector<2x2x1x128xf32>
      %137 = vector.broadcast %136 : vector<2x2x1x128xf32> to vector<2x2x8x128xf32>
      %138 = arith.addf %137, %28 : vector<2x2x8x128xf32>
      %c0_58 = arith.constant 0 : index
      %c2_59 = arith.constant 2 : index
      %c0_60 = arith.constant 0 : index
      %c0_61 = arith.constant 0 : index
      %139 = vector.load %arg10[%c0_58, %c2_59, %c0_60, %c0_61] : memref<2x8x8x128xf32, #tpu.memory_space<vmem>>, vector<2x2x8x128xf32>
      tpu.vector_store %arg10[%c0_58, %c2_59, %c0_60, %c0_61], %138 {strides = array<i32>} : memref<2x8x8x128xf32, #tpu.memory_space<vmem>>, vector<2x2x8x128xf32>,
    } else {
    }
    %c0_i32_21 = arith.constant 0 : i32
    %49 = arith.cmpi ne, %arg1, %c0_i32_21 : i32
    %50 = arith.extui %49 : i1 to i32
    %c0_i32_22 = arith.constant 0 : i32
    %51 = arith.cmpi ne, %50, %c0_i32_22 : i32
    scf.if %51 {
      %c0_58 = arith.constant 0 : index
      %c2_59 = arith.constant 2 : index
      %c0_60 = arith.constant 0 : index
      %c0_61 = arith.constant 0 : index
      %136 = vector.load %arg10[%c0_58, %c2_59, %c0_60, %c0_61] : memref<2x8x8x128xf32, #tpu.memory_space<vmem>>, vector<2x2x8x128xf32>
      %137 = arith.addf %136, %28 : vector<2x2x8x128xf32>
      %c0_62 = arith.constant 0 : index
      %c2_63 = arith.constant 2 : index
      %c0_64 = arith.constant 0 : index
      %c0_65 = arith.constant 0 : index
      %138 = vector.load %arg10[%c0_62, %c2_63, %c0_64, %c0_65] : memref<2x8x8x128xf32, #tpu.memory_space<vmem>>, vector<2x2x8x128xf32>
      tpu.vector_store %arg10[%c0_62, %c2_63, %c0_64, %c0_65], %137 {strides = array<i32>} : memref<2x8x8x128xf32, #tpu.memory_space<vmem>>, vector<2x2x8x128xf32>,
    } else {
    }
    %c0_23 = arith.constant 0 : index
    %c0_24 = arith.constant 0 : index
    %c4 = arith.constant 4 : index
    %c0_25 = arith.constant 0 : index
    %c0_26 = arith.constant 0 : index
    %52 = vector.load %arg3[%c0_23, %c0_24, %c4, %c0_25, %c0_26] : memref<1x2x8x8x128xbf16, #tpu.memory_space<vmem>>, vector<1x2x2x8x128xbf16>
    %53 = vector.shape_cast %52 : vector<1x2x2x8x128xbf16> to vector<2x2x8x128xbf16>
    %54 = arith.extf %53 : vector<2x2x8x128xbf16> to vector<2x2x8x128xf32>
    %55 = vector.extract_strided_slice %0 {offsets = [0, 4, 0], sizes = [2, 2, 128], strides = [1, 1, 1]} : vector<2x8x128xf32> to vector<2x2x128xf32>
    %56 = vector.shape_cast %55 : vector<2x2x128xf32> to vector<2x2x1x128xf32>
    %57 = vector.broadcast %56 : vector<2x2x1x128xf32> to vector<2x2x8x128xf32>
    %58 = arith.mulf %54, %57 : vector<2x2x8x128xf32>
    %cst_27 = arith.constant dense<0.000000e+00> : vector<2x8x128xf32>
    %59 = vector.multi_reduction <add>, %58, %cst_27 [1] : vector<2x2x8x128xf32> to vector<2x8x128xf32>
    %60 = vector.extract_strided_slice %54 {offsets = [0, 0, 0, 0], sizes = [2, 1, 8, 128], strides = [1, 1, 1, 1]} : vector<2x2x8x128xf32> to vector<2x1x8x128xf32>
    %61 = vector.shape_cast %60 : vector<2x1x8x128xf32> to vector<2x8x128xf32>
    %62 = arith.mulf %61, %61 : vector<2x8x128xf32>
    %cst_28 = arith.constant 5.000000e-01 : f32
    %63 = vector.broadcast %cst_28 : f32 to vector<2x8x128xf32>
    %64 = arith.mulf %62, %63 : vector<2x8x128xf32>
    %65 = vector.extract_strided_slice %54 {offsets = [0, 1, 0, 0], sizes = [2, 1, 8, 128], strides = [1, 1, 1, 1]} : vector<2x2x8x128xf32> to vector<2x1x8x128xf32>
    %66 = vector.shape_cast %65 : vector<2x1x8x128xf32> to vector<2x8x128xf32>
    %67 = arith.mulf %66, %66 : vector<2x8x128xf32>
    %cst_29 = arith.constant 5.500000e-01 : f32
    %68 = vector.broadcast %cst_29 : f32 to vector<2x8x128xf32>
    %69 = arith.mulf %67, %68 : vector<2x8x128xf32>
    %70 = arith.addf %64, %69 : vector<2x8x128xf32>
    %71 = arith.addf %45, %70 : vector<2x8x128xf32>
    %c0_i32_30 = arith.constant 0 : i32
    %72 = arith.cmpi eq, %arg1, %c0_i32_30 : i32
    %73 = arith.extui %72 : i1 to i32
    %c0_i32_31 = arith.constant 0 : i32
    %74 = arith.cmpi ne, %73, %c0_i32_31 : i32
    scf.if %74 {
      %136 = vector.shape_cast %56 : vector<2x2x1x128xf32> to vector<2x2x1x128xf32>
      %137 = vector.broadcast %136 : vector<2x2x1x128xf32> to vector<2x2x8x128xf32>
      %138 = arith.addf %137, %54 : vector<2x2x8x128xf32>
      %c0_58 = arith.constant 0 : index
      %c4_59 = arith.constant 4 : index
      %c0_60 = arith.constant 0 : index
      %c0_61 = arith.constant 0 : index
      %139 = vector.load %arg10[%c0_58, %c4_59, %c0_60, %c0_61] : memref<2x8x8x128xf32, #tpu.memory_space<vmem>>, vector<2x2x8x128xf32>
      tpu.vector_store %arg10[%c0_58, %c4_59, %c0_60, %c0_61], %138 {strides = array<i32>} : memref<2x8x8x128xf32, #tpu.memory_space<vmem>>, vector<2x2x8x128xf32>,
    } else {
    }
    %c0_i32_32 = arith.constant 0 : i32
    %75 = arith.cmpi ne, %arg1, %c0_i32_32 : i32
    %76 = arith.extui %75 : i1 to i32
    %c0_i32_33 = arith.constant 0 : i32
    %77 = arith.cmpi ne, %76, %c0_i32_33 : i32
    scf.if %77 {
      %c0_58 = arith.constant 0 : index
      %c4_59 = arith.constant 4 : index
      %c0_60 = arith.constant 0 : index
      %c0_61 = arith.constant 0 : index
      %136 = vector.load %arg10[%c0_58, %c4_59, %c0_60, %c0_61] : memref<2x8x8x128xf32, #tpu.memory_space<vmem>>, vector<2x2x8x128xf32>
      %137 = arith.addf %136, %54 : vector<2x2x8x128xf32>
      %c0_62 = arith.constant 0 : index
      %c4_63 = arith.constant 4 : index
      %c0_64 = arith.constant 0 : index
      %c0_65 = arith.constant 0 : index
      %138 = vector.load %arg10[%c0_62, %c4_63, %c0_64, %c0_65] : memref<2x8x8x128xf32, #tpu.memory_space<vmem>>, vector<2x2x8x128xf32>
      tpu.vector_store %arg10[%c0_62, %c4_63, %c0_64, %c0_65], %137 {strides = array<i32>} : memref<2x8x8x128xf32, #tpu.memory_space<vmem>>, vector<2x2x8x128xf32>,
    } else {
    }
    %c0_34 = arith.constant 0 : index
    %c0_35 = arith.constant 0 : index
    %c6 = arith.constant 6 : index
    %c0_36 = arith.constant 0 : index
    %c0_37 = arith.constant 0 : index
    %78 = vector.load %arg3[%c0_34, %c0_35, %c6, %c0_36, %c0_37] : memref<1x2x8x8x128xbf16, #tpu.memory_space<vmem>>, vector<1x2x2x8x128xbf16>
    %79 = vector.shape_cast %78 : vector<1x2x2x8x128xbf16> to vector<2x2x8x128xbf16>
    %80 = arith.extf %79 : vector<2x2x8x128xbf16> to vector<2x2x8x128xf32>
    %81 = vector.extract_strided_slice %0 {offsets = [0, 6, 0], sizes = [2, 2, 128], strides = [1, 1, 1]} : vector<2x8x128xf32> to vector<2x2x128xf32>
    %82 = vector.shape_cast %81 : vector<2x2x128xf32> to vector<2x2x1x128xf32>
    %83 = vector.broadcast %82 : vector<2x2x1x128xf32> to vector<2x2x8x128xf32>
    %84 = arith.mulf %80, %83 : vector<2x2x8x128xf32>
    %cst_38 = arith.constant dense<0.000000e+00> : vector<2x8x128xf32>
    %85 = vector.multi_reduction <add>, %84, %cst_38 [1] : vector<2x2x8x128xf32> to vector<2x8x128xf32>
    %86 = vector.extract_strided_slice %80 {offsets = [0, 0, 0, 0], sizes = [2, 1, 8, 128], strides = [1, 1, 1, 1]} : vector<2x2x8x128xf32> to vector<2x1x8x128xf32>
    %87 = vector.shape_cast %86 : vector<2x1x8x128xf32> to vector<2x8x128xf32>
    %88 = arith.mulf %87, %87 : vector<2x8x128xf32>
    %cst_39 = arith.constant 6.000000e-01 : f32
    %89 = vector.broadcast %cst_39 : f32 to vector<2x8x128xf32>
    %90 = arith.mulf %88, %89 : vector<2x8x128xf32>
    %91 = vector.extract_strided_slice %80 {offsets = [0, 1, 0, 0], sizes = [2, 1, 8, 128], strides = [1, 1, 1, 1]} : vector<2x2x8x128xf32> to vector<2x1x8x128xf32>
    %92 = vector.shape_cast %91 : vector<2x1x8x128xf32> to vector<2x8x128xf32>
    %93 = arith.mulf %92, %92 : vector<2x8x128xf32>
    %cst_40 = arith.constant 6.500000e-01 : f32
    %94 = vector.broadcast %cst_40 : f32 to vector<2x8x128xf32>
    %95 = arith.mulf %93, %94 : vector<2x8x128xf32>
    %96 = arith.addf %90, %95 : vector<2x8x128xf32>
    %97 = arith.addf %71, %96 : vector<2x8x128xf32>
    %c0_i32_41 = arith.constant 0 : i32
    %98 = arith.cmpi eq, %arg1, %c0_i32_41 : i32
    %99 = arith.extui %98 : i1 to i32
    %c0_i32_42 = arith.constant 0 : i32
    %100 = arith.cmpi ne, %99, %c0_i32_42 : i32
    scf.if %100 {
      %136 = vector.shape_cast %82 : vector<2x2x1x128xf32> to vector<2x2x1x128xf32>
      %137 = vector.broadcast %136 : vector<2x2x1x128xf32> to vector<2x2x8x128xf32>
      %138 = arith.addf %137, %80 : vector<2x2x8x128xf32>
      %c0_58 = arith.constant 0 : index
      %c6_59 = arith.constant 6 : index
      %c0_60 = arith.constant 0 : index
      %c0_61 = arith.constant 0 : index
      %139 = vector.load %arg10[%c0_58, %c6_59, %c0_60, %c0_61] : memref<2x8x8x128xf32, #tpu.memory_space<vmem>>, vector<2x2x8x128xf32>
      tpu.vector_store %arg10[%c0_58, %c6_59, %c0_60, %c0_61], %138 {strides = array<i32>} : memref<2x8x8x128xf32, #tpu.memory_space<vmem>>, vector<2x2x8x128xf32>,
    } else {
    }
    %c0_i32_43 = arith.constant 0 : i32
    %101 = arith.cmpi ne, %arg1, %c0_i32_43 : i32
    %102 = arith.extui %101 : i1 to i32
    %c0_i32_44 = arith.constant 0 : i32
    %103 = arith.cmpi ne, %102, %c0_i32_44 : i32
    scf.if %103 {
      %c0_58 = arith.constant 0 : index
      %c6_59 = arith.constant 6 : index
      %c0_60 = arith.constant 0 : index
      %c0_61 = arith.constant 0 : index
      %136 = vector.load %arg10[%c0_58, %c6_59, %c0_60, %c0_61] : memref<2x8x8x128xf32, #tpu.memory_space<vmem>>, vector<2x2x8x128xf32>
      %137 = arith.addf %136, %80 : vector<2x2x8x128xf32>
      %c0_62 = arith.constant 0 : index
      %c6_63 = arith.constant 6 : index
      %c0_64 = arith.constant 0 : index
      %c0_65 = arith.constant 0 : index
      %138 = vector.load %arg10[%c0_62, %c6_63, %c0_64, %c0_65] : memref<2x8x8x128xf32, #tpu.memory_space<vmem>>, vector<2x2x8x128xf32>
      tpu.vector_store %arg10[%c0_62, %c6_63, %c0_64, %c0_65], %137 {strides = array<i32>} : memref<2x8x8x128xf32, #tpu.memory_space<vmem>>, vector<2x2x8x128xf32>,
    } else {
    }
    %104 = arith.addf %8, %33 : vector<2x8x128xf32>
    %105 = arith.addf %104, %59 : vector<2x8x128xf32>
    %106 = arith.addf %105, %85 : vector<2x8x128xf32>
    %cst_45 = arith.constant 2.500000e-01 : f32
    %107 = vector.broadcast %cst_45 : f32 to vector<2x8x128xf32>
    %108 = arith.mulf %106, %107 : vector<2x8x128xf32>
    %cst_46 = arith.constant dense<0xFF800000> : vector<2x128xf32>
    %109 = vector.multi_reduction <maximumf>, %108, %cst_46 [1] : vector<2x8x128xf32> to vector<2x128xf32>
    %110 = vector.shape_cast %109 : vector<2x128xf32> to vector<2x1x128xf32>
    %111 = vector.broadcast %110 : vector<2x1x128xf32> to vector<2x8x128xf32>
    %112 = arith.subf %108, %111 : vector<2x8x128xf32>
    %113 = math.exp %112 : vector<2x8x128xf32>
    %cst_47 = arith.constant dense<0.000000e+00> : vector<2x128xf32>
    %114 = vector.multi_reduction <add>, %113, %cst_47 [1] : vector<2x8x128xf32> to vector<2x128xf32>
    %115 = vector.shape_cast %114 : vector<2x128xf32> to vector<2x1x128xf32>
    %116 = tpu.reciprocal %115 {approx = true} : vector<2x1x128xf32> -> vector<2x1x128xf32>
    %cst_48 = arith.constant 0.353553385 : f32
    %117 = vector.broadcast %cst_48 : f32 to vector<2x1x128xf32>
    %118 = arith.mulf %116, %117 : vector<2x1x128xf32>
    %119 = vector.broadcast %118 : vector<2x1x128xf32> to vector<2x8x128xf32>
    %120 = arith.mulf %113, %119 : vector<2x8x128xf32>
    %c0_i32_49 = arith.constant 0 : i32
    %121 = arith.cmpi eq, %arg1, %c0_i32_49 : i32
    %122 = arith.extui %121 : i1 to i32
    %c0_i32_50 = arith.constant 0 : i32
    %123 = arith.cmpi ne, %122, %c0_i32_50 : i32
    scf.if %123 {
      %136 = vector.extract_strided_slice %0 {offsets = [0, 0, 0], sizes = [2, 1, 128], strides = [1, 1, 1]} : vector<2x8x128xf32> to vector<2x1x128xf32>
      %137 = vector.shape_cast %136 : vector<2x1x128xf32> to vector<2x128xf32>
      %138 = arith.mulf %137, %137 : vector<2x128xf32>
      %cst_58 = arith.constant 3.000000e-01 : f32
      %139 = vector.broadcast %cst_58 : f32 to vector<2x128xf32>
      %140 = arith.mulf %138, %139 : vector<2x128xf32>
      %141 = vector.extract_strided_slice %0 {offsets = [0, 1, 0], sizes = [2, 1, 128], strides = [1, 1, 1]} : vector<2x8x128xf32> to vector<2x1x128xf32>
      %142 = vector.shape_cast %141 : vector<2x1x128xf32> to vector<2x128xf32>
      %143 = arith.mulf %142, %142 : vector<2x128xf32>
      %cst_59 = arith.constant 3.500000e-01 : f32
      %144 = vector.broadcast %cst_59 : f32 to vector<2x128xf32>
      %145 = arith.mulf %143, %144 : vector<2x128xf32>
      %146 = arith.addf %140, %145 : vector<2x128xf32>
      %147 = vector.extract_strided_slice %0 {offsets = [0, 2, 0], sizes = [2, 1, 128], strides = [1, 1, 1]} : vector<2x8x128xf32> to vector<2x1x128xf32>
      %148 = vector.shape_cast %147 : vector<2x1x128xf32> to vector<2x128xf32>
      %149 = arith.mulf %148, %148 : vector<2x128xf32>
      %cst_60 = arith.constant 4.000000e-01 : f32
      %150 = vector.broadcast %cst_60 : f32 to vector<2x128xf32>
      %151 = arith.mulf %149, %150 : vector<2x128xf32>
      %152 = arith.addf %146, %151 : vector<2x128xf32>
      %153 = vector.extract_strided_slice %0 {offsets = [0, 3, 0], sizes = [2, 1, 128], strides = [1, 1, 1]} : vector<2x8x128xf32> to vector<2x1x128xf32>
      %154 = vector.shape_cast %153 : vector<2x1x128xf32> to vector<2x128xf32>
      %155 = arith.mulf %154, %154 : vector<2x128xf32>
      %cst_61 = arith.constant 4.500000e-01 : f32
      %156 = vector.broadcast %cst_61 : f32 to vector<2x128xf32>
      %157 = arith.mulf %155, %156 : vector<2x128xf32>
      %158 = arith.addf %152, %157 : vector<2x128xf32>
      %159 = vector.extract_strided_slice %0 {offsets = [0, 4, 0], sizes = [2, 1, 128], strides = [1, 1, 1]} : vector<2x8x128xf32> to vector<2x1x128xf32>
      %160 = vector.shape_cast %159 : vector<2x1x128xf32> to vector<2x128xf32>
      %161 = arith.mulf %160, %160 : vector<2x128xf32>
      %cst_62 = arith.constant 5.000000e-01 : f32
      %162 = vector.broadcast %cst_62 : f32 to vector<2x128xf32>
      %163 = arith.mulf %161, %162 : vector<2x128xf32>
      %164 = arith.addf %158, %163 : vector<2x128xf32>
      %165 = vector.extract_strided_slice %0 {offsets = [0, 5, 0], sizes = [2, 1, 128], strides = [1, 1, 1]} : vector<2x8x128xf32> to vector<2x1x128xf32>
      %166 = vector.shape_cast %165 : vector<2x1x128xf32> to vector<2x128xf32>
      %167 = arith.mulf %166, %166 : vector<2x128xf32>
      %cst_63 = arith.constant 5.500000e-01 : f32
      %168 = vector.broadcast %cst_63 : f32 to vector<2x128xf32>
      %169 = arith.mulf %167, %168 : vector<2x128xf32>
      %170 = arith.addf %164, %169 : vector<2x128xf32>
      %171 = vector.extract_strided_slice %0 {offsets = [0, 6, 0], sizes = [2, 1, 128], strides = [1, 1, 1]} : vector<2x8x128xf32> to vector<2x1x128xf32>
      %172 = vector.shape_cast %171 : vector<2x1x128xf32> to vector<2x128xf32>
      %173 = arith.mulf %172, %172 : vector<2x128xf32>
      %cst_64 = arith.constant 6.000000e-01 : f32
      %174 = vector.broadcast %cst_64 : f32 to vector<2x128xf32>
      %175 = arith.mulf %173, %174 : vector<2x128xf32>
      %176 = arith.addf %170, %175 : vector<2x128xf32>
      %177 = vector.extract_strided_slice %0 {offsets = [0, 7, 0], sizes = [2, 1, 128], strides = [1, 1, 1]} : vector<2x8x128xf32> to vector<2x1x128xf32>
      %178 = vector.shape_cast %177 : vector<2x1x128xf32> to vector<2x128xf32>
      %179 = arith.mulf %178, %178 : vector<2x128xf32>
      %cst_65 = arith.constant 6.500000e-01 : f32
      %180 = vector.broadcast %cst_65 : f32 to vector<2x128xf32>
      %181 = arith.mulf %179, %180 : vector<2x128xf32>
      %182 = arith.addf %176, %181 : vector<2x128xf32>
      %183 = vector.shape_cast %182 : vector<2x128xf32> to vector<2x1x128xf32>
      %184 = vector.shape_cast %183 : vector<2x1x128xf32> to vector<2x1x128xf32>
      %185 = vector.broadcast %184 : vector<2x1x128xf32> to vector<2x8x128xf32>
      %186 = arith.addf %185, %97 : vector<2x8x128xf32>
      %c0_66 = arith.constant 0 : index
      %c0_67 = arith.constant 0 : index
      %c0_68 = arith.constant 0 : index
      %187 = vector.load %arg11[%c0_66, %c0_67, %c0_68] : memref<2x8x128xf32, #tpu.memory_space<vmem>>, vector<2x8x128xf32>
      tpu.vector_store %arg11[%c0_66, %c0_67, %c0_68], %186 {strides = array<i32>} : memref<2x8x128xf32, #tpu.memory_space<vmem>>, vector<2x8x128xf32>,
    } else {
    }
    %c0_i32_51 = arith.constant 0 : i32
    %124 = arith.cmpi ne, %arg1, %c0_i32_51 : i32
    %125 = arith.extui %124 : i1 to i32
    %c0_i32_52 = arith.constant 0 : i32
    %126 = arith.cmpi ne, %125, %c0_i32_52 : i32
    scf.if %126 {
      %c0_58 = arith.constant 0 : index
      %c0_59 = arith.constant 0 : index
      %c0_60 = arith.constant 0 : index
      %136 = vector.load %arg11[%c0_58, %c0_59, %c0_60] : memref<2x8x128xf32, #tpu.memory_space<vmem>>, vector<2x8x128xf32>
      %137 = arith.addf %136, %97 : vector<2x8x128xf32>
      %c0_61 = arith.constant 0 : index
      %c0_62 = arith.constant 0 : index
      %c0_63 = arith.constant 0 : index
      %138 = vector.load %arg11[%c0_61, %c0_62, %c0_63] : memref<2x8x128xf32, #tpu.memory_space<vmem>>, vector<2x8x128xf32>
      tpu.vector_store %arg11[%c0_61, %c0_62, %c0_63], %137 {strides = array<i32>} : memref<2x8x128xf32, #tpu.memory_space<vmem>>, vector<2x8x128xf32>,
    } else {
    }
    %c0_i32_53 = arith.constant 0 : i32
    %127 = arith.cmpi eq, %arg1, %c0_i32_53 : i32
    %128 = arith.extui %127 : i1 to i32
    %c0_i32_54 = arith.constant 0 : i32
    %129 = arith.cmpi ne, %128, %c0_i32_54 : i32
    scf.if %129 {
      %cst_58 = arith.constant 9.99999993E-9 : f32
      %136 = vector.broadcast %cst_58 : f32 to vector<2x8x128xf32>
      %137 = arith.addf %120, %136 : vector<2x8x128xf32>
      %c0_59 = arith.constant 0 : index
      %c0_60 = arith.constant 0 : index
      %c0_61 = arith.constant 0 : index
      %138 = vector.load %arg9[%c0_59, %c0_60, %c0_61] : memref<2x8x128xf32, #tpu.memory_space<vmem>>, vector<2x8x128xf32>
      tpu.vector_store %arg9[%c0_59, %c0_60, %c0_61], %137 {strides = array<i32>} : memref<2x8x128xf32, #tpu.memory_space<vmem>>, vector<2x8x128xf32>,
      %139 = arith.mulf %120, %8 : vector<2x8x128xf32>
      %c0_62 = arith.constant 0 : index
      %c0_63 = arith.constant 0 : index
      %c0_64 = arith.constant 0 : index
      %c0_65 = arith.constant 0 : index
      %140 = vector.load %arg8[%c0_62, %c0_63, %c0_64, %c0_65] : memref<2x4x8x128xf32, #tpu.memory_space<vmem>>, vector<2x1x8x128xf32>
      %141 = vector.shape_cast %140 : vector<2x1x8x128xf32> to vector<2x8x128xf32>
      %142 = vector.shape_cast %139 : vector<2x8x128xf32> to vector<2x1x8x128xf32>
      tpu.vector_store %arg8[%c0_62, %c0_63, %c0_64, %c0_65], %142 {strides = array<i32>} : memref<2x4x8x128xf32, #tpu.memory_space<vmem>>, vector<2x1x8x128xf32>,
      %143 = arith.mulf %120, %33 : vector<2x8x128xf32>
      %c0_66 = arith.constant 0 : index
      %c1 = arith.constant 1 : index
      %c0_67 = arith.constant 0 : index
      %c0_68 = arith.constant 0 : index
      %144 = vector.load %arg8[%c0_66, %c1, %c0_67, %c0_68] : memref<2x4x8x128xf32, #tpu.memory_space<vmem>>, vector<2x1x8x128xf32>
      %145 = vector.shape_cast %144 : vector<2x1x8x128xf32> to vector<2x8x128xf32>
      %146 = vector.shape_cast %143 : vector<2x8x128xf32> to vector<2x1x8x128xf32>
      tpu.vector_store %arg8[%c0_66, %c1, %c0_67, %c0_68], %146 {strides = array<i32>} : memref<2x4x8x128xf32, #tpu.memory_space<vmem>>, vector<2x1x8x128xf32>,
      %147 = arith.mulf %120, %59 : vector<2x8x128xf32>
      %c0_69 = arith.constant 0 : index
      %c2_70 = arith.constant 2 : index
      %c0_71 = arith.constant 0 : index
      %c0_72 = arith.constant 0 : index
      %148 = vector.load %arg8[%c0_69, %c2_70, %c0_71, %c0_72] : memref<2x4x8x128xf32, #tpu.memory_space<vmem>>, vector<2x1x8x128xf32>
      %149 = vector.shape_cast %148 : vector<2x1x8x128xf32> to vector<2x8x128xf32>
      %150 = vector.shape_cast %147 : vector<2x8x128xf32> to vector<2x1x8x128xf32>
      tpu.vector_store %arg8[%c0_69, %c2_70, %c0_71, %c0_72], %150 {strides = array<i32>} : memref<2x4x8x128xf32, #tpu.memory_space<vmem>>, vector<2x1x8x128xf32>,
      %151 = arith.mulf %120, %85 : vector<2x8x128xf32>
      %c0_73 = arith.constant 0 : index
      %c3 = arith.constant 3 : index
      %c0_74 = arith.constant 0 : index
      %c0_75 = arith.constant 0 : index
      %152 = vector.load %arg8[%c0_73, %c3, %c0_74, %c0_75] : memref<2x4x8x128xf32, #tpu.memory_space<vmem>>, vector<2x1x8x128xf32>
      %153 = vector.shape_cast %152 : vector<2x1x8x128xf32> to vector<2x8x128xf32>
      %154 = vector.shape_cast %151 : vector<2x8x128xf32> to vector<2x1x8x128xf32>
      tpu.vector_store %arg8[%c0_73, %c3, %c0_74, %c0_75], %154 {strides = array<i32>} : memref<2x4x8x128xf32, #tpu.memory_space<vmem>>, vector<2x1x8x128xf32>,
    } else {
    }
    %c0_i32_55 = arith.constant 0 : i32
    %130 = arith.cmpi ne, %arg1, %c0_i32_55 : i32
    %131 = arith.extui %130 : i1 to i32
    %c0_i32_56 = arith.constant 0 : i32
    %132 = arith.cmpi ne, %131, %c0_i32_56 : i32
    scf.if %132 {
      %c0_58 = arith.constant 0 : index
      %c0_59 = arith.constant 0 : index
      %c0_60 = arith.constant 0 : index
      %136 = vector.load %arg9[%c0_58, %c0_59, %c0_60] : memref<2x8x128xf32, #tpu.memory_space<vmem>>, vector<2x8x128xf32>
      %137 = arith.addf %136, %120 : vector<2x8x128xf32>
      %c0_61 = arith.constant 0 : index
      %c0_62 = arith.constant 0 : index
      %c0_63 = arith.constant 0 : index
      %138 = vector.load %arg9[%c0_61, %c0_62, %c0_63] : memref<2x8x128xf32, #tpu.memory_space<vmem>>, vector<2x8x128xf32>
      tpu.vector_store %arg9[%c0_61, %c0_62, %c0_63], %137 {strides = array<i32>} : memref<2x8x128xf32, #tpu.memory_space<vmem>>, vector<2x8x128xf32>,
      %c0_64 = arith.constant 0 : index
      %c0_65 = arith.constant 0 : index
      %c0_66 = arith.constant 0 : index
      %c0_67 = arith.constant 0 : index
      %139 = vector.load %arg8[%c0_64, %c0_65, %c0_66, %c0_67] : memref<2x4x8x128xf32, #tpu.memory_space<vmem>>, vector<2x1x8x128xf32>
      %140 = vector.shape_cast %139 : vector<2x1x8x128xf32> to vector<2x8x128xf32>
      %141 = arith.mulf %120, %8 : vector<2x8x128xf32>
      %142 = arith.addf %140, %141 : vector<2x8x128xf32>
      %c0_68 = arith.constant 0 : index
      %c0_69 = arith.constant 0 : index
      %c0_70 = arith.constant 0 : index
      %c0_71 = arith.constant 0 : index
      %143 = vector.load %arg8[%c0_68, %c0_69, %c0_70, %c0_71] : memref<2x4x8x128xf32, #tpu.memory_space<vmem>>, vector<2x1x8x128xf32>
      %144 = vector.shape_cast %143 : vector<2x1x8x128xf32> to vector<2x8x128xf32>
      %145 = vector.shape_cast %142 : vector<2x8x128xf32> to vector<2x1x8x128xf32>
      tpu.vector_store %arg8[%c0_68, %c0_69, %c0_70, %c0_71], %145 {strides = array<i32>} : memref<2x4x8x128xf32, #tpu.memory_space<vmem>>, vector<2x1x8x128xf32>,
      %c0_72 = arith.constant 0 : index
      %c1 = arith.constant 1 : index
      %c0_73 = arith.constant 0 : index
      %c0_74 = arith.constant 0 : index
      %146 = vector.load %arg8[%c0_72, %c1, %c0_73, %c0_74] : memref<2x4x8x128xf32, #tpu.memory_space<vmem>>, vector<2x1x8x128xf32>
      %147 = vector.shape_cast %146 : vector<2x1x8x128xf32> to vector<2x8x128xf32>
      %148 = arith.mulf %120, %33 : vector<2x8x128xf32>
      %149 = arith.addf %147, %148 : vector<2x8x128xf32>
      %c0_75 = arith.constant 0 : index
      %c1_76 = arith.constant 1 : index
      %c0_77 = arith.constant 0 : index
      %c0_78 = arith.constant 0 : index
      %150 = vector.load %arg8[%c0_75, %c1_76, %c0_77, %c0_78] : memref<2x4x8x128xf32, #tpu.memory_space<vmem>>, vector<2x1x8x128xf32>
      %151 = vector.shape_cast %150 : vector<2x1x8x128xf32> to vector<2x8x128xf32>
      %152 = vector.shape_cast %149 : vector<2x8x128xf32> to vector<2x1x8x128xf32>
      tpu.vector_store %arg8[%c0_75, %c1_76, %c0_77, %c0_78], %152 {strides = array<i32>} : memref<2x4x8x128xf32, #tpu.memory_space<vmem>>, vector<2x1x8x128xf32>,
      %c0_79 = arith.constant 0 : index
      %c2_80 = arith.constant 2 : index
      %c0_81 = arith.constant 0 : index
      %c0_82 = arith.constant 0 : index
      %153 = vector.load %arg8[%c0_79, %c2_80, %c0_81, %c0_82] : memref<2x4x8x128xf32, #tpu.memory_space<vmem>>, vector<2x1x8x128xf32>
      %154 = vector.shape_cast %153 : vector<2x1x8x128xf32> to vector<2x8x128xf32>
      %155 = arith.mulf %120, %59 : vector<2x8x128xf32>
      %156 = arith.addf %154, %155 : vector<2x8x128xf32>
      %c0_83 = arith.constant 0 : index
      %c2_84 = arith.constant 2 : index
      %c0_85 = arith.constant 0 : index
      %c0_86 = arith.constant 0 : index
      %157 = vector.load %arg8[%c0_83, %c2_84, %c0_85, %c0_86] : memref<2x4x8x128xf32, #tpu.memory_space<vmem>>, vector<2x1x8x128xf32>
      %158 = vector.shape_cast %157 : vector<2x1x8x128xf32> to vector<2x8x128xf32>
      %159 = vector.shape_cast %156 : vector<2x8x128xf32> to vector<2x1x8x128xf32>
      tpu.vector_store %arg8[%c0_83, %c2_84, %c0_85, %c0_86], %159 {strides = array<i32>} : memref<2x4x8x128xf32, #tpu.memory_space<vmem>>, vector<2x1x8x128xf32>,
      %c0_87 = arith.constant 0 : index
      %c3 = arith.constant 3 : index
      %c0_88 = arith.constant 0 : index
      %c0_89 = arith.constant 0 : index
      %160 = vector.load %arg8[%c0_87, %c3, %c0_88, %c0_89] : memref<2x4x8x128xf32, #tpu.memory_space<vmem>>, vector<2x1x8x128xf32>
      %161 = vector.shape_cast %160 : vector<2x1x8x128xf32> to vector<2x8x128xf32>
      %162 = arith.mulf %120, %85 : vector<2x8x128xf32>
      %163 = arith.addf %161, %162 : vector<2x8x128xf32>
      %c0_90 = arith.constant 0 : index
      %c3_91 = arith.constant 3 : index
      %c0_92 = arith.constant 0 : index
      %c0_93 = arith.constant 0 : index
      %164 = vector.load %arg8[%c0_90, %c3_91, %c0_92, %c0_93] : memref<2x4x8x128xf32, #tpu.memory_space<vmem>>, vector<2x1x8x128xf32>
      %165 = vector.shape_cast %164 : vector<2x1x8x128xf32> to vector<2x8x128xf32>
      %166 = vector.shape_cast %163 : vector<2x8x128xf32> to vector<2x1x8x128xf32>
      tpu.vector_store %arg8[%c0_90, %c3_91, %c0_92, %c0_93], %166 {strides = array<i32>} : memref<2x4x8x128xf32, #tpu.memory_space<vmem>>, vector<2x1x8x128xf32>,
    } else {
    }
    %c1_i32 = arith.constant 1 : i32
    %133 = arith.cmpi eq, %arg1, %c1_i32 : i32
    %134 = arith.extui %133 : i1 to i32
    %c0_i32_57 = arith.constant 0 : i32
    %135 = arith.cmpi ne, %134, %c0_i32_57 : i32
    scf.if %135 {
      %c0_58 = arith.constant 0 : index
      %c0_59 = arith.constant 0 : index
      %c0_60 = arith.constant 0 : index
      %136 = vector.load %arg9[%c0_58, %c0_59, %c0_60] : memref<2x8x128xf32, #tpu.memory_space<vmem>>, vector<2x8x128xf32>
      %137 = tpu.reciprocal %136 {approx = true} : vector<2x8x128xf32> -> vector<2x8x128xf32>
      %c0_61 = arith.constant 0 : index
      %c0_62 = arith.constant 0 : index
      %c0_63 = arith.constant 0 : index
      %c0_64 = arith.constant 0 : index
      %138 = vector.load %arg8[%c0_61, %c0_62, %c0_63, %c0_64] : memref<2x4x8x128xf32, #tpu.memory_space<vmem>>, vector<2x1x8x128xf32>
      %139 = vector.shape_cast %138 : vector<2x1x8x128xf32> to vector<2x8x128xf32>
      %cst_65 = arith.constant 2.000000e-01 : f32
      %140 = vector.broadcast %cst_65 : f32 to vector<2x8x128xf32>
      %141 = arith.mulf %139, %140 : vector<2x8x128xf32>
      %c0_66 = arith.constant 0 : index
      %c1 = arith.constant 1 : index
      %c0_67 = arith.constant 0 : index
      %c0_68 = arith.constant 0 : index
      %142 = vector.load %arg8[%c0_66, %c1, %c0_67, %c0_68] : memref<2x4x8x128xf32, #tpu.memory_space<vmem>>, vector<2x1x8x128xf32>
      %143 = vector.shape_cast %142 : vector<2x1x8x128xf32> to vector<2x8x128xf32>
      %cst_69 = arith.constant 2.500000e-01 : f32
      %144 = vector.broadcast %cst_69 : f32 to vector<2x8x128xf32>
      %145 = arith.mulf %143, %144 : vector<2x8x128xf32>
      %146 = arith.addf %141, %145 : vector<2x8x128xf32>
      %c0_70 = arith.constant 0 : index
      %c2_71 = arith.constant 2 : index
      %c0_72 = arith.constant 0 : index
      %c0_73 = arith.constant 0 : index
      %147 = vector.load %arg8[%c0_70, %c2_71, %c0_72, %c0_73] : memref<2x4x8x128xf32, #tpu.memory_space<vmem>>, vector<2x1x8x128xf32>
      %148 = vector.shape_cast %147 : vector<2x1x8x128xf32> to vector<2x8x128xf32>
      %cst_74 = arith.constant 3.000000e-01 : f32
      %149 = vector.broadcast %cst_74 : f32 to vector<2x8x128xf32>
      %150 = arith.mulf %148, %149 : vector<2x8x128xf32>
      %151 = arith.addf %146, %150 : vector<2x8x128xf32>
      %c0_75 = arith.constant 0 : index
      %c3 = arith.constant 3 : index
      %c0_76 = arith.constant 0 : index
      %c0_77 = arith.constant 0 : index
      %152 = vector.load %arg8[%c0_75, %c3, %c0_76, %c0_77] : memref<2x4x8x128xf32, #tpu.memory_space<vmem>>, vector<2x1x8x128xf32>
      %153 = vector.shape_cast %152 : vector<2x1x8x128xf32> to vector<2x8x128xf32>
      %cst_78 = arith.constant 3.500000e-01 : f32
      %154 = vector.broadcast %cst_78 : f32 to vector<2x8x128xf32>
      %155 = arith.mulf %153, %154 : vector<2x8x128xf32>
      %156 = arith.addf %151, %155 : vector<2x8x128xf32>
      %157 = arith.mulf %156, %137 : vector<2x8x128xf32>
      %cst_79 = arith.constant 5.000000e-02 : f32
      %158 = vector.broadcast %cst_79 : f32 to vector<2x8x128xf32>
      %159 = arith.addf %158, %157 : vector<2x8x128xf32>
      %c0_80 = arith.constant 0 : index
      %c0_81 = arith.constant 0 : index
      %c0_82 = arith.constant 0 : index
      %c0_83 = arith.constant 0 : index
      %160 = vector.load %arg10[%c0_80, %c0_81, %c0_82, %c0_83] : memref<2x8x8x128xf32, #tpu.memory_space<vmem>>, vector<2x1x8x128xf32>
      %161 = vector.shape_cast %160 : vector<2x1x8x128xf32> to vector<2x8x128xf32>
      %cst_84 = arith.constant 0.333333343 : f32
      %162 = vector.broadcast %cst_84 : f32 to vector<2x8x128xf32>
      %163 = arith.mulf %161, %162 : vector<2x8x128xf32>
      %164 = arith.mulf %163, %163 : vector<2x8x128xf32>
      %cst_85 = arith.constant 3.000000e-01 : f32
      %165 = vector.broadcast %cst_85 : f32 to vector<2x8x128xf32>
      %166 = arith.mulf %164, %165 : vector<2x8x128xf32>
      %c0_86 = arith.constant 0 : index
      %c1_87 = arith.constant 1 : index
      %c0_88 = arith.constant 0 : index
      %c0_89 = arith.constant 0 : index
      %167 = vector.load %arg10[%c0_86, %c1_87, %c0_88, %c0_89] : memref<2x8x8x128xf32, #tpu.memory_space<vmem>>, vector<2x1x8x128xf32>
      %168 = vector.shape_cast %167 : vector<2x1x8x128xf32> to vector<2x8x128xf32>
      %cst_90 = arith.constant 0.333333343 : f32
      %169 = vector.broadcast %cst_90 : f32 to vector<2x8x128xf32>
      %170 = arith.mulf %168, %169 : vector<2x8x128xf32>
      %171 = arith.mulf %170, %170 : vector<2x8x128xf32>
      %cst_91 = arith.constant 3.500000e-01 : f32
      %172 = vector.broadcast %cst_91 : f32 to vector<2x8x128xf32>
      %173 = arith.mulf %171, %172 : vector<2x8x128xf32>
      %174 = arith.addf %166, %173 : vector<2x8x128xf32>
      %c0_92 = arith.constant 0 : index
      %c2_93 = arith.constant 2 : index
      %c0_94 = arith.constant 0 : index
      %c0_95 = arith.constant 0 : index
      %175 = vector.load %arg10[%c0_92, %c2_93, %c0_94, %c0_95] : memref<2x8x8x128xf32, #tpu.memory_space<vmem>>, vector<2x1x8x128xf32>
      %176 = vector.shape_cast %175 : vector<2x1x8x128xf32> to vector<2x8x128xf32>
      %cst_96 = arith.constant 0.333333343 : f32
      %177 = vector.broadcast %cst_96 : f32 to vector<2x8x128xf32>
      %178 = arith.mulf %176, %177 : vector<2x8x128xf32>
      %179 = arith.mulf %178, %178 : vector<2x8x128xf32>
      %cst_97 = arith.constant 4.000000e-01 : f32
      %180 = vector.broadcast %cst_97 : f32 to vector<2x8x128xf32>
      %181 = arith.mulf %179, %180 : vector<2x8x128xf32>
      %182 = arith.addf %174, %181 : vector<2x8x128xf32>
      %c0_98 = arith.constant 0 : index
      %c3_99 = arith.constant 3 : index
      %c0_100 = arith.constant 0 : index
      %c0_101 = arith.constant 0 : index
      %183 = vector.load %arg10[%c0_98, %c3_99, %c0_100, %c0_101] : memref<2x8x8x128xf32, #tpu.memory_space<vmem>>, vector<2x1x8x128xf32>
      %184 = vector.shape_cast %183 : vector<2x1x8x128xf32> to vector<2x8x128xf32>
      %cst_102 = arith.constant 0.333333343 : f32
      %185 = vector.broadcast %cst_102 : f32 to vector<2x8x128xf32>
      %186 = arith.mulf %184, %185 : vector<2x8x128xf32>
      %187 = arith.mulf %186, %186 : vector<2x8x128xf32>
      %cst_103 = arith.constant 4.500000e-01 : f32
      %188 = vector.broadcast %cst_103 : f32 to vector<2x8x128xf32>
      %189 = arith.mulf %187, %188 : vector<2x8x128xf32>
      %190 = arith.addf %182, %189 : vector<2x8x128xf32>
      %c0_104 = arith.constant 0 : index
      %c4_105 = arith.constant 4 : index
      %c0_106 = arith.constant 0 : index
      %c0_107 = arith.constant 0 : index
      %191 = vector.load %arg10[%c0_104, %c4_105, %c0_106, %c0_107] : memref<2x8x8x128xf32, #tpu.memory_space<vmem>>, vector<2x1x8x128xf32>
      %192 = vector.shape_cast %191 : vector<2x1x8x128xf32> to vector<2x8x128xf32>
      %cst_108 = arith.constant 0.333333343 : f32
      %193 = vector.broadcast %cst_108 : f32 to vector<2x8x128xf32>
      %194 = arith.mulf %192, %193 : vector<2x8x128xf32>
      %195 = arith.mulf %194, %194 : vector<2x8x128xf32>
      %cst_109 = arith.constant 5.000000e-01 : f32
      %196 = vector.broadcast %cst_109 : f32 to vector<2x8x128xf32>
      %197 = arith.mulf %195, %196 : vector<2x8x128xf32>
      %198 = arith.addf %190, %197 : vector<2x8x128xf32>
      %c0_110 = arith.constant 0 : index
      %c5 = arith.constant 5 : index
      %c0_111 = arith.constant 0 : index
      %c0_112 = arith.constant 0 : index
      %199 = vector.load %arg10[%c0_110, %c5, %c0_111, %c0_112] : memref<2x8x8x128xf32, #tpu.memory_space<vmem>>, vector<2x1x8x128xf32>
      %200 = vector.shape_cast %199 : vector<2x1x8x128xf32> to vector<2x8x128xf32>
      %cst_113 = arith.constant 0.333333343 : f32
      %201 = vector.broadcast %cst_113 : f32 to vector<2x8x128xf32>
      %202 = arith.mulf %200, %201 : vector<2x8x128xf32>
      %203 = arith.mulf %202, %202 : vector<2x8x128xf32>
      %cst_114 = arith.constant 5.500000e-01 : f32
      %204 = vector.broadcast %cst_114 : f32 to vector<2x8x128xf32>
      %205 = arith.mulf %203, %204 : vector<2x8x128xf32>
      %206 = arith.addf %198, %205 : vector<2x8x128xf32>
      %c0_115 = arith.constant 0 : index
      %c6_116 = arith.constant 6 : index
      %c0_117 = arith.constant 0 : index
      %c0_118 = arith.constant 0 : index
      %207 = vector.load %arg10[%c0_115, %c6_116, %c0_117, %c0_118] : memref<2x8x8x128xf32, #tpu.memory_space<vmem>>, vector<2x1x8x128xf32>
      %208 = vector.shape_cast %207 : vector<2x1x8x128xf32> to vector<2x8x128xf32>
      %cst_119 = arith.constant 0.333333343 : f32
      %209 = vector.broadcast %cst_119 : f32 to vector<2x8x128xf32>
      %210 = arith.mulf %208, %209 : vector<2x8x128xf32>
      %211 = arith.mulf %210, %210 : vector<2x8x128xf32>
      %cst_120 = arith.constant 6.000000e-01 : f32
      %212 = vector.broadcast %cst_120 : f32 to vector<2x8x128xf32>
      %213 = arith.mulf %211, %212 : vector<2x8x128xf32>
      %214 = arith.addf %206, %213 : vector<2x8x128xf32>
      %c0_121 = arith.constant 0 : index
      %c7 = arith.constant 7 : index
      %c0_122 = arith.constant 0 : index
      %c0_123 = arith.constant 0 : index
      %215 = vector.load %arg10[%c0_121, %c7, %c0_122, %c0_123] : memref<2x8x8x128xf32, #tpu.memory_space<vmem>>, vector<2x1x8x128xf32>
      %216 = vector.shape_cast %215 : vector<2x1x8x128xf32> to vector<2x8x128xf32>
      %cst_124 = arith.constant 0.333333343 : f32
      %217 = vector.broadcast %cst_124 : f32 to vector<2x8x128xf32>
      %218 = arith.mulf %216, %217 : vector<2x8x128xf32>
      %219 = arith.mulf %218, %218 : vector<2x8x128xf32>
      %cst_125 = arith.constant 6.500000e-01 : f32
      %220 = vector.broadcast %cst_125 : f32 to vector<2x8x128xf32>
      %221 = arith.mulf %219, %220 : vector<2x8x128xf32>
      %222 = arith.addf %214, %221 : vector<2x8x128xf32>
      %c0_126 = arith.constant 0 : index
      %c0_127 = arith.constant 0 : index
      %c0_128 = arith.constant 0 : index
      %223 = vector.load %arg11[%c0_126, %c0_127, %c0_128] : memref<2x8x128xf32, #tpu.memory_space<vmem>>, vector<2x8x128xf32>
      %cst_129 = arith.constant 0.333333343 : f32
      %224 = vector.broadcast %cst_129 : f32 to vector<2x8x128xf32>
      %225 = arith.mulf %223, %224 : vector<2x8x128xf32>
      %cst_130 = arith.constant -2.000000e-02 : f32
      %226 = vector.broadcast %cst_130 : f32 to vector<2x8x128xf32>
      %227 = arith.addf %226, %225 : vector<2x8x128xf32>
      %228 = arith.subf %227, %222 : vector<2x8x128xf32>
      %cst_131 = arith.constant dense<0xFF800000> : vector<2x128xf32>
      %229 = vector.multi_reduction <maximumf>, %159, %cst_131 [1] : vector<2x8x128xf32> to vector<2x128xf32>
      %230 = vector.shape_cast %229 : vector<2x128xf32> to vector<2x1x128xf32>
      %231 = vector.broadcast %230 : vector<2x1x128xf32> to vector<2x8x128xf32>
      %232 = arith.subf %159, %231 : vector<2x8x128xf32>
      %233 = math.exp %232 : vector<2x8x128xf32>
      %cst_132 = arith.constant dense<0.000000e+00> : vector<2x128xf32>
      %234 = vector.multi_reduction <add>, %233, %cst_132 [1] : vector<2x8x128xf32> to vector<2x128xf32>
      %235 = vector.shape_cast %234 : vector<2x128xf32> to vector<2x1x128xf32>
      %236 = tpu.reciprocal %235 {approx = true} : vector<2x1x128xf32> -> vector<2x1x128xf32>
      %237 = vector.broadcast %236 : vector<2x1x128xf32> to vector<2x8x128xf32>
      %238 = arith.mulf %233, %237 : vector<2x8x128xf32>
      %cst_133 = arith.constant dense<0xFF800000> : vector<2x128xf32>
      %239 = vector.multi_reduction <maximumf>, %228, %cst_133 [1] : vector<2x8x128xf32> to vector<2x128xf32>
      %240 = vector.shape_cast %239 : vector<2x128xf32> to vector<2x1x128xf32>
      %241 = vector.broadcast %240 : vector<2x1x128xf32> to vector<2x8x128xf32>
      %242 = arith.subf %228, %241 : vector<2x8x128xf32>
      %243 = math.exp %242 : vector<2x8x128xf32>
      %cst_134 = arith.constant dense<0.000000e+00> : vector<2x128xf32>
      %244 = vector.multi_reduction <add>, %243, %cst_134 [1] : vector<2x8x128xf32> to vector<2x128xf32>
      %245 = vector.shape_cast %244 : vector<2x128xf32> to vector<2x1x128xf32>
      %246 = tpu.reciprocal %245 {approx = true} : vector<2x1x128xf32> -> vector<2x1x128xf32>
      %247 = vector.broadcast %246 : vector<2x1x128xf32> to vector<2x8x128xf32>
      %248 = arith.mulf %243, %247 : vector<2x8x128xf32>
      %c0_135 = arith.constant 0 : index
      %c0_136 = arith.constant 0 : index
      %249 = vector.load %arg5[%c0_135, %c0_136] : memref<2x128xf32, #tpu.memory_space<vmem>>, vector<2x128xf32>
      %250 = vector.shape_cast %249 : vector<2x128xf32> to vector<2x1x128xf32>
      %cst_137 = arith.constant 1.000000e+00 : f32
      %251 = vector.broadcast %cst_137 : f32 to vector<2x1x128xf32>
      %252 = arith.subf %251, %250 : vector<2x1x128xf32>
      %253 = vector.broadcast %252 : vector<2x1x128xf32> to vector<2x8x128xf32>
      %254 = arith.mulf %253, %238 : vector<2x8x128xf32>
      %255 = vector.broadcast %250 : vector<2x1x128xf32> to vector<2x8x128xf32>
      %256 = arith.mulf %255, %248 : vector<2x8x128xf32>
      %257 = arith.addf %254, %256 : vector<2x8x128xf32>
      %c0_138 = arith.constant 0 : index
      %c0_139 = arith.constant 0 : index
      %c0_140 = arith.constant 0 : index
      %258 = vector.load %arg4[%c0_138, %c0_139, %c0_140] : memref<2x8x128xf32, #tpu.memory_space<vmem>>, vector<2x8x128xf32>
      %cst_141 = arith.constant dense<0xFF800000> : vector<2x128xf32>
      %259 = vector.multi_reduction <maximumf>, %257, %cst_141 [1] : vector<2x8x128xf32> to vector<2x128xf32>
      %260 = vector.shape_cast %259 : vector<2x128xf32> to vector<2x1x128xf32>
      %261 = tpu.iota {dimensions = array<i32: 1>} : vector<2x8x128xi32>
      %262 = arith.sitofp %261 : vector<2x8x128xi32> to vector<2x8x128xf32>
      %263 = vector.broadcast %260 : vector<2x1x128xf32> to vector<2x8x128xf32>
      %264 = arith.cmpf oeq, %257, %263 : vector<2x8x128xf32>
      %cst_142 = arith.constant 8.000000e+00 : f32
      %265 = vector.broadcast %cst_142 : f32 to vector<2x8x128xf32>
      %266 = arith.select %264, %262, %265 : vector<2x8x128xi1>, vector<2x8x128xf32>
      %cst_143 = arith.constant dense<0x7F800000> : vector<2x128xf32>
      %267 = vector.multi_reduction <minimumf>, %266, %cst_143 [1] : vector<2x8x128xf32> to vector<2x128xf32>
      %268 = vector.shape_cast %267 : vector<2x128xf32> to vector<2x1x128xf32>
      %269 = vector.broadcast %268 : vector<2x1x128xf32> to vector<2x8x128xf32>
      %270 = arith.cmpf oeq, %262, %269 : vector<2x8x128xf32>
      %cst_144 = arith.constant 0.000000e+00 : f32
      %271 = vector.broadcast %cst_144 : f32 to vector<2x8x128xf32>
      %272 = arith.select %270, %258, %271 : vector<2x8x128xi1>, vector<2x8x128xf32>
      %cst_145 = arith.constant dense<0.000000e+00> : vector<2x128xf32>
      %273 = vector.multi_reduction <add>, %272, %cst_145 [1] : vector<2x8x128xf32> to vector<2x128xf32>
      %274 = vector.shape_cast %260 : vector<2x1x128xf32> to vector<2x128xf32>
      %cst_146 = arith.constant dense<0xFF800000> : vector<2x128xf32>
      %275 = vector.multi_reduction <maximumf>, %248, %cst_146 [1] : vector<2x8x128xf32> to vector<2x128xf32>
      %cst_147 = arith.constant dense<0xFF800000> : vector<2x128xf32>
      %276 = vector.multi_reduction <maximumf>, %238, %cst_147 [1] : vector<2x8x128xf32> to vector<2x128xf32>
      %277 = vector.extract_strided_slice %258 {offsets = [0, 2, 0], sizes = [2, 1, 128], strides = [1, 1, 1]} : vector<2x8x128xf32> to vector<2x1x128xf32>
      %278 = vector.shape_cast %277 : vector<2x1x128xf32> to vector<2x128xf32>
      %279 = tpu.reciprocal %278 {approx = true} : vector<2x128xf32> -> vector<2x128xf32>
      %280 = vector.extract_strided_slice %258 {offsets = [0, 1, 0], sizes = [2, 1, 128], strides = [1, 1, 1]} : vector<2x8x128xf32> to vector<2x1x128xf32>
      %281 = vector.shape_cast %280 : vector<2x1x128xf32> to vector<2x128xf32>
      %282 = tpu.reciprocal %281 {approx = true} : vector<2x128xf32> -> vector<2x128xf32>
      %283 = arith.subf %279, %282 : vector<2x128xf32>
      %284 = tpu.reciprocal %273 {approx = true} : vector<2x128xf32> -> vector<2x128xf32>
      %cst_148 = arith.constant 5.000000e-01 : f32
      %285 = vector.broadcast %cst_148 : f32 to vector<2x128xf32>
      %286 = arith.mulf %285, %283 : vector<2x128xf32>
      %287 = arith.addf %284, %286 : vector<2x128xf32>
      %cst_149 = arith.constant 5.000000e-01 : f32
      %288 = vector.broadcast %cst_149 : f32 to vector<2x128xf32>
      %289 = arith.mulf %288, %283 : vector<2x128xf32>
      %290 = arith.subf %284, %289 : vector<2x128xf32>
      %c0_150 = arith.constant 0 : index
      %c0_151 = arith.constant 0 : index
      %c0_152 = arith.constant 0 : index
      %291 = vector.load %arg6[%c0_150, %c0_151, %c0_152] : memref<2x8x128xf32, #tpu.memory_space<vmem>>, vector<2x8x128xf32>
      tpu.vector_store %arg6[%c0_150, %c0_151, %c0_152], %257 {strides = array<i32>} : memref<2x8x128xf32, #tpu.memory_space<vmem>>, vector<2x8x128xf32>,
      %c0_153 = arith.constant 0 : index
      %c0_154 = arith.constant 0 : index
      %c0_155 = arith.constant 0 : index
      %292 = vector.load %arg7[%c0_153, %c0_154, %c0_155] : memref<6x2x128xf32, #tpu.memory_space<vmem>>, vector<1x2x128xf32>
      %293 = vector.shape_cast %292 : vector<1x2x128xf32> to vector<2x128xf32>
      %294 = vector.shape_cast %273 : vector<2x128xf32> to vector<1x2x128xf32>
      tpu.vector_store %arg7[%c0_153, %c0_154, %c0_155], %294 {strides = array<i32>} : memref<6x2x128xf32, #tpu.memory_space<vmem>>, vector<1x2x128xf32>,
      %c1_156 = arith.constant 1 : index
      %c0_157 = arith.constant 0 : index
      %c0_158 = arith.constant 0 : index
      %295 = vector.load %arg7[%c1_156, %c0_157, %c0_158] : memref<6x2x128xf32, #tpu.memory_space<vmem>>, vector<1x2x128xf32>
      %296 = vector.shape_cast %295 : vector<1x2x128xf32> to vector<2x128xf32>
      %297 = vector.shape_cast %274 : vector<2x128xf32> to vector<1x2x128xf32>
      tpu.vector_store %arg7[%c1_156, %c0_157, %c0_158], %297 {strides = array<i32>} : memref<6x2x128xf32, #tpu.memory_space<vmem>>, vector<1x2x128xf32>,
      %c2_159 = arith.constant 2 : index
      %c0_160 = arith.constant 0 : index
      %c0_161 = arith.constant 0 : index
      %298 = vector.load %arg7[%c2_159, %c0_160, %c0_161] : memref<6x2x128xf32, #tpu.memory_space<vmem>>, vector<1x2x128xf32>
      %299 = vector.shape_cast %298 : vector<1x2x128xf32> to vector<2x128xf32>
      %300 = vector.shape_cast %275 : vector<2x128xf32> to vector<1x2x128xf32>
      tpu.vector_store %arg7[%c2_159, %c0_160, %c0_161], %300 {strides = array<i32>} : memref<6x2x128xf32, #tpu.memory_space<vmem>>, vector<1x2x128xf32>,
      %c3_162 = arith.constant 3 : index
      %c0_163 = arith.constant 0 : index
      %c0_164 = arith.constant 0 : index
      %301 = vector.load %arg7[%c3_162, %c0_163, %c0_164] : memref<6x2x128xf32, #tpu.memory_space<vmem>>, vector<1x2x128xf32>
      %302 = vector.shape_cast %301 : vector<1x2x128xf32> to vector<2x128xf32>
      %303 = vector.shape_cast %276 : vector<2x128xf32> to vector<1x2x128xf32>
      tpu.vector_store %arg7[%c3_162, %c0_163, %c0_164], %303 {strides = array<i32>} : memref<6x2x128xf32, #tpu.memory_space<vmem>>, vector<1x2x128xf32>,
      %c4_165 = arith.constant 4 : index
      %c0_166 = arith.constant 0 : index
      %c0_167 = arith.constant 0 : index
      %304 = vector.load %arg7[%c4_165, %c0_166, %c0_167] : memref<6x2x128xf32, #tpu.memory_space<vmem>>, vector<1x2x128xf32>
      %305 = vector.shape_cast %304 : vector<1x2x128xf32> to vector<2x128xf32>
      %306 = vector.shape_cast %287 : vector<2x128xf32> to vector<1x2x128xf32>
      tpu.vector_store %arg7[%c4_165, %c0_166, %c0_167], %306 {strides = array<i32>} : memref<6x2x128xf32, #tpu.memory_space<vmem>>, vector<1x2x128xf32>,
      %c5_168 = arith.constant 5 : index
      %c0_169 = arith.constant 0 : index
      %c0_170 = arith.constant 0 : index
      %307 = vector.load %arg7[%c5_168, %c0_169, %c0_170] : memref<6x2x128xf32, #tpu.memory_space<vmem>>, vector<1x2x128xf32>
      %308 = vector.shape_cast %307 : vector<1x2x128xf32> to vector<2x128xf32>
      %309 = vector.shape_cast %290 : vector<2x128xf32> to vector<1x2x128xf32>
      tpu.vector_store %arg7[%c5_168, %c0_169, %c0_170], %309 {strides = array<i32>} : memref<6x2x128xf32, #tpu.memory_space<vmem>>, vector<1x2x128xf32>,
    } else {
    }
    return
  }
  func.func @transform_0(%arg0: i32, %arg1: i32) -> (i32, i32, i32) {
    %c0_i32 = arith.constant 0 : i32
    %c0_i32_0 = arith.constant 0 : i32
    %c0_i32_1 = arith.constant 0 : i32
    return %c0_i32, %c0_i32_0, %arg0 : i32, i32, i32
  }
  func.func @transform_1(%arg0: i32, %arg1: i32) -> (i32, i32, i32, i32, i32) {
    %c0_i32 = arith.constant 0 : i32
    %c0_i32_0 = arith.constant 0 : i32
    %c0_i32_1 = arith.constant 0 : i32
    %c0_i32_2 = arith.constant 0 : i32
    return %arg1, %c0_i32, %c0_i32_0, %c0_i32_1, %arg0 : i32, i32, i32, i32, i32
  }
  func.func @transform_2(%arg0: i32, %arg1: i32) -> (i32, i32, i32) {
    %c0_i32 = arith.constant 0 : i32
    %c0_i32_0 = arith.constant 0 : i32
    %c0_i32_1 = arith.constant 0 : i32
    return %c0_i32, %c0_i32_0, %arg0 : i32, i32, i32
  }
  func.func @transform_3(%arg0: i32, %arg1: i32) -> (i32, i32) {
    %c0_i32 = arith.constant 0 : i32
    %c0_i32_0 = arith.constant 0 : i32
    return %c0_i32, %arg0 : i32, i32
  }
  func.func @transform_4(%arg0: i32, %arg1: i32) -> (i32, i32, i32) {
    %c0_i32 = arith.constant 0 : i32
    %c0_i32_0 = arith.constant 0 : i32
    %c0_i32_1 = arith.constant 0 : i32
    return %c0_i32, %c0_i32_0, %arg0 : i32, i32, i32
  }
  func.func @transform_5(%arg0: i32, %arg1: i32) -> (i32, i32, i32) {
    %c0_i32 = arith.constant 0 : i32
    %c0_i32_0 = arith.constant 0 : i32
    %c0_i32_1 = arith.constant 0 : i32
    return %c0_i32, %c0_i32_0, %arg0 : i32, i32, i32
  }
}

</mosaic_0001>

<llo_original>
// kernel: tpu_custom_call.1
$region0: #{tpu_custom_call.1}
  #allocation0 [shape = 'u32[]', space=smem, size = 0x4, offset = 0x4, fixed_abs, tag = 'smem constant byte address 0x4 - core index']
  #allocation1 [shape = 'u32[144,128]{1,0:T(1,128)}', space=vmem, size = 0x12000, scoped, tag = 'internal scratch']
  #allocation2 [shape = 'f32[2,4,8,128]{3,2,1,0:T(8,128)}', space=vmem, size = 0x8000, scoped, tag = 'scratch operand']
  #allocation3 [shape = 'f32[2,8,128]{2,1,0:T(8,128)}', space=vmem, size = 0x2000, scoped, tag = 'scratch operand']
  #allocation4 [shape = 'f32[2,8,8,128]{3,2,1,0:T(8,128)}', space=vmem, size = 0x10000, scoped, tag = 'scratch operand']
  #allocation5 [shape = 'f32[2,8,128]{2,1,0:T(8,128)}', space=vmem, size = 0x2000, scoped, tag = 'scratch operand']
  %s0 = inlined_call_operand.hbm [shape: f32[2,8,256], index: 0, kind: input, shape index: {}]
  %s1 = inlined_call_operand.hbm [shape: bf16[2,2,8,8,256], index: 1, kind: input, shape index: {}]
  %s2 = inlined_call_operand.hbm [shape: f32[2,8,256], index: 2, kind: input, shape index: {}]
  %s3 = inlined_call_operand.vmem [shape: f32[2,256], index: 3, kind: input, shape index: {}]
  %s4 = inlined_call_operand.hbm [shape: f32[2,8,256], index: 4, kind: output, shape index: {0}]
  %s5 = inlined_call_operand.hbm [shape: f32[6,2,256], index: 5, kind: output, shape index: {1}]
  %6 = xla_tuple %s4, %s5
  %s7 = sld [smem:[#allocation0]]
  $region121: #{tpu_custom_call.1} parent=0
    _
  %s9 = ssub.s32 1, %s7
  %s10 = scalar_select 0, %s9, %s7
  $region1: #{tpu_custom_call.1} parent=0
    #allocation6 [shape = 'u8[16384]{0}', space=vmem, size = 0x4000, scoped, tag = 'input window, operand 0']
    #allocation7 [shape = 's32[2]{0}', space=sflag, size = 0x8, scoped, tag = 'scoped memory for tpu_custom_call.1']
    #allocation8 [shape = 's32[2]{0}', space=sflag, size = 0x8, scoped, tag = 'scoped memory for tpu_custom_call.1']
    #allocation9 [shape = 'u8[65536]{0}', space=vmem, size = 0x10000, scoped, tag = 'input window, operand 1']
    #allocation10 [shape = 's32[2]{0}', space=sflag, size = 0x8, scoped, tag = 'scoped memory for tpu_custom_call.1']
    #allocation11 [shape = 'u8[16384]{0}', space=vmem, size = 0x4000, scoped, tag = 'input window, operand 2']
    #allocation12 [shape = 'u8[16384]{0}', space=vmem, size = 0x4000, scoped, tag = 'output window, operand 0']
    #allocation13 [shape = 'u8[12288]{0}', space=vmem, size = 0x3000, scoped, tag = 'output window, operand 1']
    #allocation14 [shape = 's32[2]{0}', space=sflag, size = 0x8, scoped, tag = 'scoped memory for tpu_custom_call.1']
    %11 = vsyncpa [#allocation7], 0
    %s12 = scalar_lea.sflag [#allocation7], 1
    %13 = vsyncpa %s12, 0
    %14 = vsyncpa [#allocation10], 0
    %s15 = scalar_lea.sflag [#allocation10], 1
    %16 = vsyncpa %s15, 0
    %17 = vsyncpa [#allocation8], 0
    %s18 = scalar_lea.sflag [#allocation8], 1
    %19 = vsyncpa %s18, 0
    %20 = vsyncpa [#allocation14], 0
    %s21 = scalar_lea.sflag [#allocation14], 1
    %22 = vsyncpa %s21, 0
    loop: start=0, step=1, limit=6
    $region2: #{tpu_custom_call.1} parent=1 // loop_pre_header
      _
    $region3: #{tpu_custom_call.1} parent=1 // loop_header
      %s24 = sphi 0, %s28
      %p25 = scmp.ge.s32.totalorder %s24, 6
      %s31 = sphi 0, %s43
      %s32 = sphi 0, %s39
      %s33 = sphi 0, %s31
      %s34 = sphi 0, %s32
      %s35 = sphi 0, %s33
      %s36 = sphi 0, %s34
      %s46 = sphi 0, %s48
      %s49 = sphi 0, %s46
      %s50 = sphi 0, %s49
      %s66 = sphi 0, %s50
      %s74 = sphi 0, %s76
      %s77 = sphi 0, %s74
      %s78 = sphi 0, %s77
      %s94 = sphi 0, %s78
      %s100 = sphi 0, %s102
      %s103 = sphi 0, %s100
      %s104 = sphi 0, %s103
      %s120 = sphi 0, %s104
      %s126 = sphi 0, %s128
      %s129 = sphi 0, %s126
      %s130 = sphi 0, %s129
      %s146 = sphi 0, %s130
      %s152 = sphi 0, %s154
      %s155 = sphi 0, %s152
      %s156 = sphi 0, %s155
      %s172 = sphi 0, %s156
      %s178 = sphi 0, %s180
      %s181 = sphi 0, %s178
      %s182 = sphi 0, %s181
      %s198 = sphi 0, %s182
    $region4: #{tpu_custom_call.1} parent=1 // loop_header_branch
      %27 = sbr.rel (%p25) target = $region8
    $region5: #{tpu_custom_call.1} parent=1 // loop_body
      %s29 = ssub.s32 %s24, 1
      %s30 = ssub.s32 %s24, 2
      %s37 = sadd.s32 1, %s32
      %p38 = scmp.ge.s32.totalorder %s37, 2
      %s39 = scalar_select %p38, 0, %s37
      %s40 = sadd.s32 1, %s31
      %s41 = scalar_select %p38, %s40, %s31
      %p42 = scmp.ge.s32.totalorder %s41, 2
      %s43 = scalar_select %p42, 0, %s41
      %s44 = ssub.s32 %s31, %s43
      %p45 = scmp.eq.s32.totalorder %s44, 0
      %s47 = sadd.s32 %s46, 1
      %s48 = scalar_select %p45, %s46, %s47
      %p51 = pneg %p45
      %p52 = scmp.eq.s32.totalorder %s24, 3
      %p53 = por %p51, %p52
      %p54 = scmp.ne.s32.totalorder %s46, %s49
      %p55 = scmp.eq.s32.totalorder %s24, 0
      %p56 = por %p54, %p55
      %p57 = scmp.ne.s32.totalorder %s46, %s49
      %p58 = scmp.eq.s32.totalorder %s29, 3
      %p59 = por %p57, %p58
      %p60 = scmp.ne.s32.totalorder %s49, %s50
      %p61 = scmp.eq.s32.totalorder %s29, 0
      %p62 = por %p60, %p61
      %p63 = scmp.ne.s32.totalorder %s49, %s50
      %p64 = scmp.eq.s32.totalorder %s30, 3
      %p65 = por %p63, %p64
      %p67 = scmp.ne.s32.totalorder %s50, %s66
      %p68 = scmp.eq.s32.totalorder %s30, 0
      %p69 = por %p67, %p68
      %s70 = ssub.s32 %s32, %s39
      %s71 = ssub.s32 %s31, %s43
      %s72 = sor.u32 %s70, %s71
      %p73 = scmp.eq.s32.totalorder %s72, 0
      %s75 = sadd.s32 %s74, 1
      %s76 = scalar_select %p73, %s74, %s75
      %p79 = pneg %p73
      %p80 = scmp.eq.s32.totalorder %s24, 3
      %p81 = por %p79, %p80
      %p82 = scmp.ne.s32.totalorder %s74, %s77
      %p83 = scmp.eq.s32.totalorder %s24, 0
      %p84 = por %p82, %p83
      %p85 = scmp.ne.s32.totalorder %s74, %s77
      %p86 = scmp.eq.s32.totalorder %s29, 3
      %p87 = por %p85, %p86
      %p88 = scmp.ne.s32.totalorder %s77, %s78
      %p89 = scmp.eq.s32.totalorder %s29, 0
      %p90 = por %p88, %p89
      %p91 = scmp.ne.s32.totalorder %s77, %s78
      %p92 = scmp.eq.s32.totalorder %s30, 3
      %p93 = por %p91, %p92
      %p95 = scmp.ne.s32.totalorder %s78, %s94
      %p96 = scmp.eq.s32.totalorder %s30, 0
      %p97 = por %p95, %p96
      %s98 = ssub.s32 %s31, %s43
      %p99 = scmp.eq.s32.totalorder %s98, 0
      %s101 = sadd.s32 %s100, 1
      %s102 = scalar_select %p99, %s100, %s101
      %p105 = pneg %p99
      %p106 = scmp.eq.s32.totalorder %s24, 3
      %p107 = por %p105, %p106
      %p108 = scmp.ne.s32.totalorder %s100, %s103
      %p109 = scmp.eq.s32.totalorder %s24, 0
      %p110 = por %p108, %p109
      %p111 = scmp.ne.s32.totalorder %s100, %s103
      %p112 = scmp.eq.s32.totalorder %s29, 3
      %p113 = por %p111, %p112
      %p114 = scmp.ne.s32.totalorder %s103, %s104
      %p115 = scmp.eq.s32.totalorder %s29, 0
      %p116 = por %p114, %p115
      %p117 = scmp.ne.s32.totalorder %s103, %s104
      %p118 = scmp.eq.s32.totalorder %s30, 3
      %p119 = por %p117, %p118
      %p121 = scmp.ne.s32.totalorder %s104, %s120
      %p122 = scmp.eq.s32.totalorder %s30, 0
      %p123 = por %p121, %p122
      %s124 = ssub.s32 %s31, %s43
      %p125 = scmp.eq.s32.totalorder %s124, 0
      %s127 = sadd.s32 %s126, 1
      %s128 = scalar_select %p125, %s126, %s127
      %p131 = pneg %p125
      %p132 = scmp.eq.s32.totalorder %s24, 3
      %p133 = por %p131, %p132
      %p134 = scmp.ne.s32.totalorder %s126, %s129
      %p135 = scmp.eq.s32.totalorder %s24, 0
      %p136 = por %p134, %p135
      %p137 = scmp.ne.s32.totalorder %s126, %s129
      %p138 = scmp.eq.s32.totalorder %s29, 3
      %p139 = por %p137, %p138
      %p140 = scmp.ne.s32.totalorder %s129, %s130
      %p141 = scmp.eq.s32.totalorder %s29, 0
      %p142 = por %p140, %p141
      %p143 = scmp.ne.s32.totalorder %s129, %s130
      %p144 = scmp.eq.s32.totalorder %s30, 3
      %p145 = por %p143, %p144
      %p147 = scmp.ne.s32.totalorder %s130, %s146
      %p148 = scmp.eq.s32.totalorder %s30, 0
      %p149 = por %p147, %p148
      %s150 = ssub.s32 %s31, %s43
      %p151 = scmp.eq.s32.totalorder %s150, 0
      %s153 = sadd.s32 %s152, 1
      %s154 = scalar_select %p151, %s152, %s153
      %p157 = pneg %p151
      %p158 = scmp.eq.s32.totalorder %s24, 3
      %p159 = por %p157, %p158
      %p160 = scmp.ne.s32.totalorder %s152, %s155
      %p161 = scmp.eq.s32.totalorder %s24, 0
      %p162 = por %p160, %p161
      %p163 = scmp.ne.s32.totalorder %s152, %s155
      %p164 = scmp.eq.s32.totalorder %s29, 3
      %p165 = por %p163, %p164
      %p166 = scmp.ne.s32.totalorder %s155, %s156
      %p167 = scmp.eq.s32.totalorder %s29, 0
      %p168 = por %p166, %p167
      %p169 = scmp.ne.s32.totalorder %s155, %s156
      %p170 = scmp.eq.s32.totalorder %s30, 3
      %p171 = por %p169, %p170
      %p173 = scmp.ne.s32.totalorder %s156, %s172
      %p174 = scmp.eq.s32.totalorder %s30, 0
      %p175 = por %p173, %p174
      %s176 = ssub.s32 %s31, %s43
      %p177 = scmp.eq.s32.totalorder %s176, 0
      %s179 = sadd.s32 %s178, 1
      %s180 = scalar_select %p177, %s178, %s179
      %p183 = pneg %p177
      %p184 = scmp.eq.s32.totalorder %s24, 3
      %p185 = por %p183, %p184
      %p186 = scmp.ne.s32.totalorder %s178, %s181
      %p187 = scmp.eq.s32.totalorder %s24, 0
      %p188 = por %p186, %p187
      %p189 = scmp.ne.s32.totalorder %s178, %s181
      %p190 = scmp.eq.s32.totalorder %s29, 3
      %p191 = por %p189, %p190
      %p192 = scmp.ne.s32.totalorder %s181, %s182
      %p193 = scmp.eq.s32.totalorder %s29, 0
      %p194 = por %p192, %p193
      %p195 = scmp.ne.s32.totalorder %s181, %s182
      %p196 = scmp.eq.s32.totalorder %s30, 3
      %p197 = por %p195, %p196
      %p199 = scmp.ne.s32.totalorder %s182, %s198
      %p200 = scmp.eq.s32.totalorder %s30, 0
      %p201 = por %p199, %p200
      %p202 = scmp.le.s32.totalorder 1, %s24
      %p203 = scmp.lt.s32.totalorder %s24, 5
      %p204 = pnand %p202, %p203
      %p205 = pneg %p204
      // Predicated region
      $region9: #{tpu_custom_call.1} parent=5 // pred_check
        _
      $region10: #{tpu_custom_call.1} parent=5 // pred_check_branch
        %207 = sbr.rel (%p204) target = $region12
      $region11: #{tpu_custom_call.1} parent=5 // pred_region
        %s208 = ssub.s32 %s24, 1
      $region12: #{tpu_custom_call.1} parent=5 // pred_fallthru
        _
      %p209 = scmp.lt.s32.totalorder %s24, 4
      // Predicated region
      $region13: #{tpu_custom_call.1} parent=5 // pred_check
        %p210 = pneg %p209
      $region14: #{tpu_custom_call.1} parent=5 // pred_check_branch
        %212 = sbr.rel (%p210) target = $region16
      $region15: #{tpu_custom_call.1} parent=5 // pred_region
        // Predicated region
        $region17: #{tpu_custom_call.1} parent=15 // pred_check
          %p213 = pneg %p56
        $region18: #{tpu_custom_call.1} parent=15 // pred_check_branch
          %215 = sbr.rel (%p213) target = $region20
        $region19: #{tpu_custom_call.1} parent=15 // pred_region
          %s216 = sand.u32 %s46, 1
          %s217 = scalar_lea.sflag [#allocation7], %s216
          %s218 = sand.u32 %s46, 1
          %s219 = smul.addr %s218, 16
          %s220 = scalar_lea.vmem [#allocation6], %s219
          %s222 = ssub.s32 256, 256
          %223 = vsyncadd %s217, %s222
          %s224 = smul.addr %s31, 128
          %s225 = scalar_lea.hbm %s0, %s224
          %s226 = sshll.u32 %s220, 4
          %s227 = int_to_ptr.vmem [resolvable:$true] %s226
          %232 = dma.hbm_to_vmem [thread:$0]  %s225, 256, %s227, %s217, 256, 128, 8
        $region20: #{tpu_custom_call.1} parent=15 // pred_fallthru
          _
        // Predicated region
        $region21: #{tpu_custom_call.1} parent=15 // pred_check
          %p233 = pneg %p84
        $region22: #{tpu_custom_call.1} parent=15 // pred_check_branch
          %235 = sbr.rel (%p233) target = $region24
        $region23: #{tpu_custom_call.1} parent=15 // pred_region
          %s236 = sand.u32 %s24, 1
          %s237 = scalar_lea.sflag [#allocation10], %s236
          %s238 = sand.u32 %s74, 1
          %s239 = smul.addr %s238, 64
          %s240 = scalar_lea.vmem [#allocation9], %s239
          %s242 = ssub.s32 1024, 1024
          %243 = vsyncadd %s237, %s242
          %s244 = smul.addr %s32, 32
          %s245 = sadd.s32 %s31, %s244
          %s246 = smul.addr %s245, 64
          %s247 = scalar_lea.hbm %s1, %s246
          %s248 = sshll.u32 %s240, 4
          %s249 = int_to_ptr.vmem [resolvable:$true] %s248
          %254 = dma.hbm_to_vmem [thread:$0]  %s247, 1024, %s249, %s237, 128, 64, 4
        $region24: #{tpu_custom_call.1} parent=15 // pred_fallthru
          _
        // Predicated region
        $region25: #{tpu_custom_call.1} parent=15 // pred_check
          %p255 = pneg %p110
        $region26: #{tpu_custom_call.1} parent=15 // pred_check_branch
          %257 = sbr.rel (%p255) target = $region28
        $region27: #{tpu_custom_call.1} parent=15 // pred_region
          %s258 = sand.u32 %s24, 1
          %s259 = scalar_lea.sflag [#allocation10], %s258
          %s260 = sand.u32 %s100, 1
          %s261 = smul.addr %s260, 16
          %s262 = scalar_lea.vmem [#allocation11], %s261
          %s264 = ssub.s32 256, 256
          %265 = vsyncadd %s259, %s264
          %s266 = smul.addr %s31, 128
          %s267 = scalar_lea.hbm %s2, %s266
          %s268 = sshll.u32 %s262, 4
          %s269 = int_to_ptr.vmem [resolvable:$true] %s268
          %274 = dma.hbm_to_vmem [thread:$0]  %s267, 256, %s269, %s259, 256, 128, 8
        $region28: #{tpu_custom_call.1} parent=15 // pred_fallthru
          _
        // Predicated region
        $region29: #{tpu_custom_call.1} parent=15 // pred_check
          %p275 = pneg %p136
        $region30: #{tpu_custom_call.1} parent=15 // pred_check_branch
          %277 = sbr.rel (%p275) target = $region32
        $region31: #{tpu_custom_call.1} parent=15 // pred_region
          %p278 = scmp.lt.s32.totalorder %s31, 1
          %s279 = scalar_select %p278, %s31, 1
          %s280 = smul.addr %s279, 2
          %s281 = scalar_lea.vmem %s3, %s280
        $region32: #{tpu_custom_call.1} parent=15 // pred_fallthru
          _
      $region16: #{tpu_custom_call.1} parent=5 // pred_fallthru
        _
      %p282 = scmp.le.s32.totalorder 1, %s24
      %p283 = scmp.lt.s32.totalorder %s24, 5
      %p284 = pnand %p282, %p283
      %p285 = pneg %p284
      // Predicated region
      $region33: #{tpu_custom_call.1} parent=5 // pred_check
        _
      $region34: #{tpu_custom_call.1} parent=5 // pred_check_branch
        %287 = sbr.rel (%p284) target = $region36
      $region35: #{tpu_custom_call.1} parent=5 // pred_region
        %s288 = ssub.s32 %s24, 1
        %s289 = sand.u32 %s49, 1
        %s290 = scalar_lea.sflag [#allocation7], %s289
        %s291 = sand.u32 %s49, 1
        %s292 = smul.addr %s291, 16
        %s293 = scalar_lea.vmem [#allocation6], %s292
        // Predicated region
        $region37: #{tpu_custom_call.1} parent=35 // pred_check
          %p294 = pneg %p62
        $region38: #{tpu_custom_call.1} parent=35 // pred_check_branch
          %296 = sbr.rel (%p294) target = $region40
        $region39: #{tpu_custom_call.1} parent=35 // pred_region
          %297 = dma.done %s290, 256
        $region40: #{tpu_custom_call.1} parent=35 // pred_fallthru
          _
        %s298 = sand.u32 %s29, 1
        %s299 = scalar_lea.sflag [#allocation10], %s298
        %s300 = sand.u32 %s77, 1
        %s301 = smul.addr %s300, 64
        %s302 = scalar_lea.vmem [#allocation9], %s301
        // Predicated region
        $region41: #{tpu_custom_call.1} parent=35 // pred_check
          %p303 = pneg %p90
        $region42: #{tpu_custom_call.1} parent=35 // pred_check_branch
          %305 = sbr.rel (%p303) target = $region44
        $region43: #{tpu_custom_call.1} parent=35 // pred_region
          %306 = dma.done %s299, 1024
        $region44: #{tpu_custom_call.1} parent=35 // pred_fallthru
          _
        %s307 = sand.u32 %s29, 1
        %s308 = scalar_lea.sflag [#allocation10], %s307
        %s309 = sand.u32 %s103, 1
        %s310 = smul.addr %s309, 16
        %s311 = scalar_lea.vmem [#allocation11], %s310
        // Predicated region
        $region45: #{tpu_custom_call.1} parent=35 // pred_check
          %p312 = pneg %p116
        $region46: #{tpu_custom_call.1} parent=35 // pred_check_branch
          %314 = sbr.rel (%p312) target = $region48
        $region47: #{tpu_custom_call.1} parent=35 // pred_region
          %315 = dma.done %s308, 256
        $region48: #{tpu_custom_call.1} parent=35 // pred_fallthru
          _
        %s316 = sand.u32 %s49, 1
        %s317 = scalar_lea.sflag [#allocation7], %s316
        %s318 = sand.u32 %s49, 1
        %s319 = smul.addr %s318, 16
        %s320 = scalar_lea.vmem [#allocation6], %s319
        %p321 = pneg %p62
        %p322 = pneg %p59
        %s323 = sand.u32 %s29, 1
        %s324 = scalar_lea.sflag [#allocation10], %s323
        %s325 = sand.u32 %s77, 1
        %s326 = smul.addr %s325, 64
        %s327 = scalar_lea.vmem [#allocation9], %s326
        %p328 = pneg %p90
        %p329 = pneg %p87
        %s330 = sand.u32 %s29, 1
        %s331 = scalar_lea.sflag [#allocation10], %s330
        %s332 = sand.u32 %s103, 1
        %s333 = smul.addr %s332, 16
        %s334 = scalar_lea.vmem [#allocation11], %s333
        %p335 = pneg %p116
        %p336 = pneg %p113
        %p337 = scmp.lt.s32.totalorder %s33, 1
        %s338 = scalar_select %p337, %s33, 1
        %s339 = smul.addr %s338, 2
        %s340 = scalar_lea.vmem %s3, %s339
        %p341 = pneg %p142
        %p342 = pneg %p139
        %p343 = pneg %p168
        %p344 = pneg %p165
        %s345 = sand.u32 %s155, 1
        %s346 = scalar_lea.sflag [#allocation8], %s345
        %s347 = sand.u32 %s155, 1
        %s348 = smul.addr %s347, 16
        %s349 = scalar_lea.vmem [#allocation12], %s348
        %p350 = pneg %p194
        %p351 = pneg %p191
        %s352 = sand.u32 %s181, 1
        %s353 = scalar_lea.sflag [#allocation14], %s352
        %s354 = sand.u32 %s181, 1
        %s355 = smul.addr %s354, 12
        %s356 = scalar_lea.vmem [#allocation13], %s355
        %p357 = scmp.lt.s32.totalorder %s33, 1
        %s358 = scalar_select %p357, %s33, 1
        %s359 = smul.addr %s358, 2
        %s360 = scalar_lea.vmem %s3, %s359
        %v361 = vld [vmem:[%s293] sm:$0xff]
        %v362 = vld [vmem:[%s293 + $0x8] sm:$0xff]
        %v363 = vld [vmem:[%s302] sm:$0xf]
        %v364 = vld [vmem:[%s302 + $0x4] sm:$0xf]
        %v365 = vld [vmem:[%s302 + $0x20] sm:$0xf]
        %v366 = vld [vmem:[%s302 + $0x24] sm:$0xf]
        %v367 = vunpack.c.l.bf16 %v363
        %v368 = vunpack.c.l.bf16 %v364
        %v369 = vunpack.c.l.bf16 %v365
        %v370 = vunpack.c.l.bf16 %v366
        %v374 = vunpack.c.l.s4 1966171168
        %v375 = vunpack.c.0.s8 %v374
        %v376 = vlaneseq
        %v377 = vshrl.u32 %v376, 7
        %v378 = vsub.s32 %v375, %v377
        %v379 = vrot.slane %v361, %v378
        %v380 = vcombine.high %v379, %v379
        %v382 = vunpack.c.l.s4 1966171168
        %v383 = vunpack.c.0.s8 %v382
        %v384 = vlaneseq
        %v385 = vshrl.u32 %v384, 7
        %v386 = vsub.s32 %v383, %v385
        %v387 = vrot.slane %v379, %v386
        %v389 = vunpack.c.l.s4 1966171168
        %v390 = vunpack.c.0.s8 %v389
        %v391 = vlaneseq
        %v392 = vshrl.u32 %v391, 7
        %v393 = vsub.s32 %v390, %v392
        %v394 = vrot.slane %v380, %v393
        %v396 = vunpack.c.l.s4 1966171168
        %v397 = vunpack.c.0.s8 %v396
        %v398 = vlaneseq
        %v399 = vshrl.u32 %v398, 7
        %v400 = vsub.s32 %v397, %v399
        %v401 = vrot.slane %v362, %v400
        %v402 = vcombine.high %v401, %v401
        %v404 = vunpack.c.l.s4 1966171168
        %v405 = vunpack.c.0.s8 %v404
        %v406 = vlaneseq
        %v407 = vshrl.u32 %v406, 7
        %v408 = vsub.s32 %v405, %v407
        %v409 = vrot.slane %v401, %v408
        %v411 = vunpack.c.l.s4 1966171168
        %v412 = vunpack.c.0.s8 %v411
        %v413 = vlaneseq
        %v414 = vshrl.u32 %v413, 7
        %v415 = vsub.s32 %v412, %v414
        %v416 = vrot.slane %v402, %v415
        %v417 = vlaneseq
        %v418 = vshrl.u32 %v417, 7
        %v419 = vsub.s32 0, %v418
        %v420 = vrot.slane %v387, %v419
        %v421 = vlaneseq
        %v422 = vshrl.u32 %v421, 7
        %v423 = vsub.s32 0, %v422
        %v424 = vrot.slane %v394, %v423
        %v425 = vlaneseq
        %v426 = vshrl.u32 %v425, 7
        %v427 = vsub.s32 0, %v426
        %v428 = vrot.slane %v409, %v427
        %v429 = vlaneseq
        %v430 = vshrl.u32 %v429, 7
        %v431 = vsub.s32 0, %v430
        %v432 = vrot.slane %v416, %v431
        %v437 = vmul.f32 %v367, %v420
        %v438 = vmul.f32 %v368, %v424
        %v439 = vmul.f32 %v369, %v428
        %v440 = vmul.f32 %v370, %v432
        %v441 = vadd.f32 %v437, %v438
        %v442 = vadd.f32 %v439, %v440
        %v443 = vmul.f32 %v367, %v367
        %v444 = vmul.f32 %v369, %v369
        %v445 = vmul.f32 %v443, 0.3
        %v446 = vmul.f32 %v444, 0.3
        %v447 = vmul.f32 %v368, %v368
        %v448 = vmul.f32 %v370, %v370
        %v449 = vmul.f32 %v447, 0.35
        %v450 = vmul.f32 %v448, 0.35
        %v451 = vadd.f32 %v445, %v449
        %v452 = vadd.f32 %v446, %v450
        %p453 = scmp.eq.s32.totalorder %s34, 0
        // Predicated region
        $region49: #{tpu_custom_call.1} parent=35 // pred_check
          %p454 = pneg %p453
        $region50: #{tpu_custom_call.1} parent=35 // pred_check_branch
          %456 = sbr.rel (%p454) target = $region52
        $region51: #{tpu_custom_call.1} parent=35 // pred_region
          %v457 = vadd.f32 %v420, %v367
          %v458 = vadd.f32 %v424, %v368
          %v459 = vadd.f32 %v428, %v369
          %v460 = vadd.f32 %v432, %v370
          %461 = vst [vmem:[#allocation4] sm:$0xff] %v457
          %462 = vst [vmem:[#allocation4 + $0x8] sm:$0xff] %v458
          %463 = vst [vmem:[#allocation4 + $0x40] sm:$0xff] %v459
          %464 = vst [vmem:[#allocation4 + $0x48] sm:$0xff] %v460
        $region52: #{tpu_custom_call.1} parent=35 // pred_fallthru
          _
        %p465 = scmp.ne.s32.totalorder %s34, 0
        // Predicated region
        $region53: #{tpu_custom_call.1} parent=35 // pred_check
          %p466 = pneg %p465
        $region54: #{tpu_custom_call.1} parent=35 // pred_check_branch
          %468 = sbr.rel (%p466) target = $region56
        $region55: #{tpu_custom_call.1} parent=35 // pred_region
          %v469 = vld [vmem:[#allocation4] sm:$0xff]
          %v470 = vld [vmem:[#allocation4 + $0x8] sm:$0xff]
          %v471 = vld [vmem:[#allocation4 + $0x40] sm:$0xff]
          %v472 = vld [vmem:[#allocation4 + $0x48] sm:$0xff]
          %v473 = vadd.f32 %v469, %v367
          %v474 = vadd.f32 %v470, %v368
          %v475 = vadd.f32 %v471, %v369
          %v476 = vadd.f32 %v472, %v370
          %477 = vst [vmem:[#allocation4] sm:$0xff] %v473
          %478 = vst [vmem:[#allocation4 + $0x8] sm:$0xff] %v474
          %479 = vst [vmem:[#allocation4 + $0x40] sm:$0xff] %v475
          %480 = vst [vmem:[#allocation4 + $0x48] sm:$0xff] %v476
        $region56: #{tpu_custom_call.1} parent=35 // pred_fallthru
          _
        %s481 = scalar_lea.vmem %s302, 8 [#allocation9]
        %v482 = vld [vmem:[%s481] sm:$0xf]
        %v483 = vld [vmem:[%s481 + $0x4] sm:$0xf]
        %v484 = vld [vmem:[%s481 + $0x20] sm:$0xf]
        %v485 = vld [vmem:[%s481 + $0x24] sm:$0xf]
        %v486 = vunpack.c.l.bf16 %v482
        %v487 = vunpack.c.l.bf16 %v483
        %v488 = vunpack.c.l.bf16 %v484
        %v489 = vunpack.c.l.bf16 %v485
        %v490 = vcombine.high %v387, %v387
        %v491 = vcombine.high %v394, %v394
        %v492 = vcombine.high %v409, %v409
        %v493 = vcombine.high %v416, %v416
        %v494 = vlaneseq
        %v495 = vshrl.u32 %v494, 7
        %v496 = vsub.s32 0, %v495
        %v497 = vrot.slane %v490, %v496
        %v498 = vlaneseq
        %v499 = vshrl.u32 %v498, 7
        %v500 = vsub.s32 0, %v499
        %v501 = vrot.slane %v491, %v500
        %v502 = vlaneseq
        %v503 = vshrl.u32 %v502, 7
        %v504 = vsub.s32 0, %v503
        %v505 = vrot.slane %v492, %v504
        %v506 = vlaneseq
        %v507 = vshrl.u32 %v506, 7
        %v508 = vsub.s32 0, %v507
        %v509 = vrot.slane %v493, %v508
        %v514 = vmul.f32 %v486, %v497
        %v515 = vmul.f32 %v487, %v501
        %v516 = vmul.f32 %v488, %v505
        %v517 = vmul.f32 %v489, %v509
        %v518 = vadd.f32 %v514, %v515
        %v519 = vadd.f32 %v516, %v517
        %v520 = vmul.f32 %v486, %v486
        %v521 = vmul.f32 %v488, %v488
        %v522 = vmul.f32 %v520, 0.4
        %v523 = vmul.f32 %v521, 0.4
        %v524 = vmul.f32 %v487, %v487
        %v525 = vmul.f32 %v489, %v489
        %v526 = vmul.f32 %v524, 0.45
        %v527 = vmul.f32 %v525, 0.45
        %v528 = vadd.f32 %v522, %v526
        %v529 = vadd.f32 %v523, %v527
        %v530 = vadd.f32 %v451, %v528
        %v531 = vadd.f32 %v452, %v529
        // Predicated region
        $region57: #{tpu_custom_call.1} parent=35 // pred_check
          %p532 = pneg %p453
        $region58: #{tpu_custom_call.1} parent=35 // pred_check_branch
          %534 = sbr.rel (%p532) target = $region60
        $region59: #{tpu_custom_call.1} parent=35 // pred_region
          %v535 = vadd.f32 %v497, %v486
          %v536 = vadd.f32 %v501, %v487
          %v537 = vadd.f32 %v505, %v488
          %v538 = vadd.f32 %v509, %v489
          %s539 = scalar_lea.vmem [#allocation4], 16
          %540 = vst [vmem:[%s539] sm:$0xff] %v535
          %541 = vst [vmem:[%s539 + $0x8] sm:$0xff] %v536
          %542 = vst [vmem:[%s539 + $0x40] sm:$0xff] %v537
          %543 = vst [vmem:[%s539 + $0x48] sm:$0xff] %v538
        $region60: #{tpu_custom_call.1} parent=35 // pred_fallthru
          _
        // Predicated region
        $region61: #{tpu_custom_call.1} parent=35 // pred_check
          %p544 = pneg %p465
        $region62: #{tpu_custom_call.1} parent=35 // pred_check_branch
          %546 = sbr.rel (%p544) target = $region64
        $region63: #{tpu_custom_call.1} parent=35 // pred_region
          %s547 = scalar_lea.vmem [#allocation4], 16
          %v548 = vld [vmem:[%s547] sm:$0xff]
          %v549 = vld [vmem:[%s547 + $0x8] sm:$0xff]
          %v550 = vld [vmem:[%s547 + $0x40] sm:$0xff]
          %v551 = vld [vmem:[%s547 + $0x48] sm:$0xff]
          %v552 = vadd.f32 %v548, %v486
          %v553 = vadd.f32 %v549, %v487
          %v554 = vadd.f32 %v550, %v488
          %v555 = vadd.f32 %v551, %v489
          %556 = vst [vmem:[%s547] sm:$0xff] %v552
          %557 = vst [vmem:[%s547 + $0x8] sm:$0xff] %v553
          %558 = vst [vmem:[%s547 + $0x40] sm:$0xff] %v554
          %559 = vst [vmem:[%s547 + $0x48] sm:$0xff] %v555
        $region64: #{tpu_custom_call.1} parent=35 // pred_fallthru
          _
        %s560 = scalar_lea.vmem %s302, 16 [#allocation9]
        %v561 = vld [vmem:[%s560] sm:$0xf]
        %v562 = vld [vmem:[%s560 + $0x4] sm:$0xf]
        %v563 = vld [vmem:[%s560 + $0x20] sm:$0xf]
        %v564 = vld [vmem:[%s560 + $0x24] sm:$0xf]
        %v565 = vunpack.c.l.bf16 %v561
        %v566 = vunpack.c.l.bf16 %v562
        %v567 = vunpack.c.l.bf16 %v563
        %v568 = vunpack.c.l.bf16 %v564
        %v569 = vcombine.high %v361, %v361
        %v571 = vunpack.c.l.s4 1966171168
        %v572 = vunpack.c.0.s8 %v571
        %v573 = vlaneseq
        %v574 = vshrl.u32 %v573, 7
        %v575 = vsub.s32 %v572, %v574
        %v576 = vrot.slane %v569, %v575
        %v577 = vcombine.high %v576, %v576
        %v579 = vunpack.c.l.s4 1966171168
        %v580 = vunpack.c.0.s8 %v579
        %v581 = vlaneseq
        %v582 = vshrl.u32 %v581, 7
        %v583 = vsub.s32 %v580, %v582
        %v584 = vrot.slane %v576, %v583
        %v586 = vunpack.c.l.s4 1966171168
        %v587 = vunpack.c.0.s8 %v586
        %v588 = vlaneseq
        %v589 = vshrl.u32 %v588, 7
        %v590 = vsub.s32 %v587, %v589
        %v591 = vrot.slane %v577, %v590
        %v592 = vcombine.high %v362, %v362
        %v594 = vunpack.c.l.s4 1966171168
        %v595 = vunpack.c.0.s8 %v594
        %v596 = vlaneseq
        %v597 = vshrl.u32 %v596, 7
        %v598 = vsub.s32 %v595, %v597
        %v599 = vrot.slane %v592, %v598
        %v600 = vcombine.high %v599, %v599
        %v602 = vunpack.c.l.s4 1966171168
        %v603 = vunpack.c.0.s8 %v602
        %v604 = vlaneseq
        %v605 = vshrl.u32 %v604, 7
        %v606 = vsub.s32 %v603, %v605
        %v607 = vrot.slane %v599, %v606
        %v609 = vunpack.c.l.s4 1966171168
        %v610 = vunpack.c.0.s8 %v609
        %v611 = vlaneseq
        %v612 = vshrl.u32 %v611, 7
        %v613 = vsub.s32 %v610, %v612
        %v614 = vrot.slane %v600, %v613
        %v615 = vlaneseq
        %v616 = vshrl.u32 %v615, 7
        %v617 = vsub.s32 0, %v616
        %v618 = vrot.slane %v584, %v617
        %v619 = vlaneseq
        %v620 = vshrl.u32 %v619, 7
        %v621 = vsub.s32 0, %v620
        %v622 = vrot.slane %v591, %v621
        %v623 = vlaneseq
        %v624 = vshrl.u32 %v623, 7
        %v625 = vsub.s32 0, %v624
        %v626 = vrot.slane %v607, %v625
        %v627 = vlaneseq
        %v628 = vshrl.u32 %v627, 7
        %v629 = vsub.s32 0, %v628
        %v630 = vrot.slane %v614, %v629
        %v635 = vmul.f32 %v565, %v618
        %v636 = vmul.f32 %v566, %v622
        %v637 = vmul.f32 %v567, %v626
        %v638 = vmul.f32 %v568, %v630
        %v639 = vadd.f32 %v635, %v636
        %v640 = vadd.f32 %v637, %v638
        %v641 = vmul.f32 %v565, %v565
        %v642 = vmul.f32 %v567, %v567
        %v643 = vmul.f32 %v641, 0.5
        %v644 = vmul.f32 %v642, 0.5
        %v645 = vmul.f32 %v566, %v566
        %v646 = vmul.f32 %v568, %v568
        %v647 = vmul.f32 %v645, 0.55
        %v648 = vmul.f32 %v646, 0.55
        %v649 = vadd.f32 %v643, %v647
        %v650 = vadd.f32 %v644, %v648
        %v651 = vadd.f32 %v530, %v649
        %v652 = vadd.f32 %v531, %v650
        // Predicated region
        $region65: #{tpu_custom_call.1} parent=35 // pred_check
          %p653 = pneg %p453
        $region66: #{tpu_custom_call.1} parent=35 // pred_check_branch
          %655 = sbr.rel (%p653) target = $region68
        $region67: #{tpu_custom_call.1} parent=35 // pred_region
          %v656 = vadd.f32 %v618, %v565
          %v657 = vadd.f32 %v622, %v566
          %v658 = vadd.f32 %v626, %v567
          %v659 = vadd.f32 %v630, %v568
          %s660 = scalar_lea.vmem [#allocation4], 32
          %661 = vst [vmem:[%s660] sm:$0xff] %v656
          %662 = vst [vmem:[%s660 + $0x8] sm:$0xff] %v657
          %663 = vst [vmem:[%s660 + $0x40] sm:$0xff] %v658
          %664 = vst [vmem:[%s660 + $0x48] sm:$0xff] %v659
        $region68: #{tpu_custom_call.1} parent=35 // pred_fallthru
          _
        // Predicated region
        $region69: #{tpu_custom_call.1} parent=35 // pred_check
          %p665 = pneg %p465
        $region70: #{tpu_custom_call.1} parent=35 // pred_check_branch
          %667 = sbr.rel (%p665) target = $region72
        $region71: #{tpu_custom_call.1} parent=35 // pred_region
          %s668 = scalar_lea.vmem [#allocation4], 32
          %v669 = vld [vmem:[%s668] sm:$0xff]
          %v670 = vld [vmem:[%s668 + $0x8] sm:$0xff]
          %v671 = vld [vmem:[%s668 + $0x40] sm:$0xff]
          %v672 = vld [vmem:[%s668 + $0x48] sm:$0xff]
          %v673 = vadd.f32 %v669, %v565
          %v674 = vadd.f32 %v670, %v566
          %v675 = vadd.f32 %v671, %v567
          %v676 = vadd.f32 %v672, %v568
          %677 = vst [vmem:[%s668] sm:$0xff] %v673
          %678 = vst [vmem:[%s668 + $0x8] sm:$0xff] %v674
          %679 = vst [vmem:[%s668 + $0x40] sm:$0xff] %v675
          %680 = vst [vmem:[%s668 + $0x48] sm:$0xff] %v676
        $region72: #{tpu_custom_call.1} parent=35 // pred_fallthru
          _
        %s681 = scalar_lea.vmem %s302, 24 [#allocation9]
        %v682 = vld [vmem:[%s681] sm:$0xf]
        %v683 = vld [vmem:[%s681 + $0x4] sm:$0xf]
        %v684 = vld [vmem:[%s681 + $0x20] sm:$0xf]
        %v685 = vld [vmem:[%s681 + $0x24] sm:$0xf]
        %v686 = vunpack.c.l.bf16 %v682
        %v687 = vunpack.c.l.bf16 %v683
        %v688 = vunpack.c.l.bf16 %v684
        %v689 = vunpack.c.l.bf16 %v685
        %v690 = vcombine.high %v584, %v584
        %v691 = vcombine.high %v591, %v591
        %v692 = vcombine.high %v607, %v607
        %v693 = vcombine.high %v614, %v614
        %v694 = vlaneseq
        %v695 = vshrl.u32 %v694, 7
        %v696 = vsub.s32 0, %v695
        %v697 = vrot.slane %v690, %v696
        %v698 = vlaneseq
        %v699 = vshrl.u32 %v698, 7
        %v700 = vsub.s32 0, %v699
        %v701 = vrot.slane %v691, %v700
        %v702 = vlaneseq
        %v703 = vshrl.u32 %v702, 7
        %v704 = vsub.s32 0, %v703
        %v705 = vrot.slane %v692, %v704
        %v706 = vlaneseq
        %v707 = vshrl.u32 %v706, 7
        %v708 = vsub.s32 0, %v707
        %v709 = vrot.slane %v693, %v708
        %v714 = vmul.f32 %v686, %v697
        %v715 = vmul.f32 %v687, %v701
        %v716 = vmul.f32 %v688, %v705
        %v717 = vmul.f32 %v689, %v709
        %v718 = vadd.f32 %v714, %v715
        %v719 = vadd.f32 %v716, %v717
        %v720 = vmul.f32 %v686, %v686
        %v721 = vmul.f32 %v688, %v688
        %v722 = vmul.f32 %v720, 0.6
        %v723 = vmul.f32 %v721, 0.6
        %v724 = vmul.f32 %v687, %v687
        %v725 = vmul.f32 %v689, %v689
        %v726 = vmul.f32 %v724, 0.65
        %v727 = vmul.f32 %v725, 0.65
        %v728 = vadd.f32 %v722, %v726
        %v729 = vadd.f32 %v723, %v727
        %v730 = vadd.f32 %v651, %v728
        %v731 = vadd.f32 %v652, %v729
        // Predicated region
        $region73: #{tpu_custom_call.1} parent=35 // pred_check
          %p732 = pneg %p453
        $region74: #{tpu_custom_call.1} parent=35 // pred_check_branch
          %734 = sbr.rel (%p732) target = $region76
        $region75: #{tpu_custom_call.1} parent=35 // pred_region
          %v735 = vadd.f32 %v697, %v686
          %v736 = vadd.f32 %v701, %v687
          %v737 = vadd.f32 %v705, %v688
          %v738 = vadd.f32 %v709, %v689
          %s739 = scalar_lea.vmem [#allocation4], 48
          %740 = vst [vmem:[%s739] sm:$0xff] %v735
          %741 = vst [vmem:[%s739 + $0x8] sm:$0xff] %v736
          %742 = vst [vmem:[%s739 + $0x40] sm:$0xff] %v737
          %743 = vst [vmem:[%s739 + $0x48] sm:$0xff] %v738
        $region76: #{tpu_custom_call.1} parent=35 // pred_fallthru
          _
        // Predicated region
        $region77: #{tpu_custom_call.1} parent=35 // pred_check
          %p744 = pneg %p465
        $region78: #{tpu_custom_call.1} parent=35 // pred_check_branch
          %746 = sbr.rel (%p744) target = $region80
        $region79: #{tpu_custom_call.1} parent=35 // pred_region
          %s747 = scalar_lea.vmem [#allocation4], 48
          %v748 = vld [vmem:[%s747] sm:$0xff]
          %v749 = vld [vmem:[%s747 + $0x8] sm:$0xff]
          %v750 = vld [vmem:[%s747 + $0x40] sm:$0xff]
          %v751 = vld [vmem:[%s747 + $0x48] sm:$0xff]
          %v752 = vadd.f32 %v748, %v686
          %v753 = vadd.f32 %v749, %v687
          %v754 = vadd.f32 %v750, %v688
          %v755 = vadd.f32 %v751, %v689
          %756 = vst [vmem:[%s747] sm:$0xff] %v752
          %757 = vst [vmem:[%s747 + $0x8] sm:$0xff] %v753
          %758 = vst [vmem:[%s747 + $0x40] sm:$0xff] %v754
          %759 = vst [vmem:[%s747 + $0x48] sm:$0xff] %v755
        $region80: #{tpu_custom_call.1} parent=35 // pred_fallthru
          _
        %v760 = vadd.f32 %v441, %v518
        %v761 = vadd.f32 %v442, %v519
        %v762 = vadd.f32 %v760, %v639
        %v763 = vadd.f32 %v761, %v640
        %v764 = vadd.f32 %v762, %v718
        %v765 = vadd.f32 %v763, %v719
        %v766 = vmul.f32 %v764, 0.25
        %v767 = vmul.f32 %v765, 0.25
        %v768 = vrot.slane %v766, 4
        %v769 = vmax.f32 %v766, %v768
        %v770 = vrot.slane %v769, 2
        %v771 = vmax.f32 %v769, %v770
        %v772 = vrot.slane %v771, 1
        %v773 = vmax.f32 %v771, %v772
        %v774 = vrot.slane %v767, 4
        %v775 = vmax.f32 %v767, %v774
        %v776 = vrot.slane %v775, 2
        %v777 = vmax.f32 %v775, %v776
        %v778 = vrot.slane %v777, 1
        %v779 = vmax.f32 %v777, %v778
        %v780 = vsub.f32 %v766, %v773
        %v781 = vsub.f32 %v767, %v779
        %v782 = vmul.f32 %v780, 1.442695
        %v783 = vpow.pop %v782
        %v784 = vmul.f32 %v781, 1.442695
        %v785 = vpow.pop %v784
        %v786 = vrot.slane %v783, 4
        %v787 = vadd.f32 %v783, %v786
        %v788 = vrot.slane %v787, 2
        %v789 = vadd.f32 %v787, %v788
        %v790 = vrot.slane %v789, 1
        %v791 = vadd.f32 %v789, %v790
        %v792 = vrot.slane %v785, 4
        %v793 = vadd.f32 %v785, %v792
        %v794 = vrot.slane %v793, 2
        %v795 = vadd.f32 %v793, %v794
        %v796 = vrot.slane %v795, 1
        %v797 = vadd.f32 %v795, %v796
        %v798 = vrcp.pop %v791
        %v799 = vrcp.pop %v797
        %v800 = vmul.f32 %v798, 0.35355338
        %v801 = vmul.f32 %v799, 0.35355338
        %v802 = vmul.f32 %v783, %v800
        %v803 = vmul.f32 %v785, %v801
        // Predicated region
        $region81: #{tpu_custom_call.1} parent=35 // pred_check
          %p804 = pneg %p453
        $region82: #{tpu_custom_call.1} parent=35 // pred_check_branch
          %806 = sbr.rel (%p804) target = $region84
        $region83: #{tpu_custom_call.1} parent=35 // pred_region
          %v807 = vmul.f32 %v361, %v361
          %v808 = vmul.f32 %v362, %v362
          %v809 = vmul.f32 %v807, 0.3
          %v810 = vmul.f32 %v808, 0.3
          %v811 = vmul.f32 %v807, 0.35
          %v812 = vmul.f32 %v808, 0.35
          %v815 = vrot.slane %v811, 1
          %v816 = vrot.slane %v812, 1
          %v819 = vadd.f32 %v809, %v815
          %v820 = vadd.f32 %v810, %v816
          %v821 = vmul.f32 %v807, 0.4
          %v822 = vmul.f32 %v808, 0.4
          %v825 = vrot.slane %v821, 2
          %v826 = vrot.slane %v822, 2
          %v829 = vadd.f32 %v819, %v825
          %v830 = vadd.f32 %v820, %v826
          %v831 = vmul.f32 %v807, 0.45
          %v832 = vmul.f32 %v808, 0.45
          %v835 = vrot.slane %v831, 3
          %v836 = vrot.slane %v832, 3
          %v839 = vadd.f32 %v829, %v835
          %v840 = vadd.f32 %v830, %v836
          %v841 = vmul.f32 %v807, 0.5
          %v842 = vmul.f32 %v808, 0.5
          %v845 = vrot.slane %v841, 4
          %v846 = vrot.slane %v842, 4
          %v849 = vadd.f32 %v839, %v845
          %v850 = vadd.f32 %v840, %v846
          %v851 = vmul.f32 %v807, 0.55
          %v852 = vmul.f32 %v808, 0.55
          %v855 = vrot.slane %v851, 5
          %v856 = vrot.slane %v852, 5
          %v859 = vadd.f32 %v849, %v855
          %v860 = vadd.f32 %v850, %v856
          %v861 = vmul.f32 %v807, 0.6
          %v862 = vmul.f32 %v808, 0.6
          %v865 = vrot.slane %v861, 6
          %v866 = vrot.slane %v862, 6
          %v869 = vadd.f32 %v859, %v865
          %v870 = vadd.f32 %v860, %v866
          %v871 = vmul.f32 %v807, 0.65
          %v872 = vmul.f32 %v808, 0.65
          %v875 = vrot.slane %v871, 7
          %v876 = vrot.slane %v872, 7
          %v879 = vadd.f32 %v869, %v875
          %v880 = vadd.f32 %v870, %v876
          %v881 = vlaneseq
          %v882 = vshrl.u32 %v881, 7
          %v883 = vsub.s32 0, %v882
          %v884 = vrot.slane %v879, %v883
          %v885 = vlaneseq
          %v886 = vshrl.u32 %v885, 7
          %v887 = vsub.s32 0, %v886
          %v888 = vrot.slane %v880, %v887
          %v889 = vadd.f32 %v884, %v730
          %v890 = vadd.f32 %v888, %v731
          %891 = vst [vmem:[#allocation5] sm:$0xff] %v889
          %892 = vst [vmem:[#allocation5 + $0x8] sm:$0xff] %v890
        $region84: #{tpu_custom_call.1} parent=35 // pred_fallthru
          _
        // Predicated region
        $region85: #{tpu_custom_call.1} parent=35 // pred_check
          %p893 = pneg %p465
        $region86: #{tpu_custom_call.1} parent=35 // pred_check_branch
          %895 = sbr.rel (%p893) target = $region88
        $region87: #{tpu_custom_call.1} parent=35 // pred_region
          %v896 = vld [vmem:[#allocation5] sm:$0xff]
          %v897 = vld [vmem:[#allocation5 + $0x8] sm:$0xff]
          %v898 = vadd.f32 %v896, %v730
          %v899 = vadd.f32 %v897, %v731
          %900 = vst [vmem:[#allocation5] sm:$0xff] %v898
          %901 = vst [vmem:[#allocation5 + $0x8] sm:$0xff] %v899
        $region88: #{tpu_custom_call.1} parent=35 // pred_fallthru
          _
        // Predicated region
        $region89: #{tpu_custom_call.1} parent=35 // pred_check
          %p902 = pneg %p453
        $region90: #{tpu_custom_call.1} parent=35 // pred_check_branch
          %904 = sbr.rel (%p902) target = $region92
        $region91: #{tpu_custom_call.1} parent=35 // pred_region
          %v905 = vadd.f32 %v802, 1e-08
          %v906 = vadd.f32 %v803, 1e-08
          %907 = vst [vmem:[#allocation3] sm:$0xff] %v905
          %908 = vst [vmem:[#allocation3 + $0x8] sm:$0xff] %v906
          %v909 = vmul.f32 %v802, %v441
          %v910 = vmul.f32 %v803, %v442
          %911 = vst [vmem:[#allocation2] sm:$0xff] %v909
          %912 = vst [vmem:[#allocation2 + $0x20] sm:$0xff] %v910
          %v913 = vmul.f32 %v802, %v518
          %v914 = vmul.f32 %v803, %v519
          %s915 = scalar_lea.vmem [#allocation2], 8
          %916 = vst [vmem:[%s915] sm:$0xff] %v913
          %917 = vst [vmem:[%s915 + $0x20] sm:$0xff] %v914
          %v918 = vmul.f32 %v802, %v639
          %v919 = vmul.f32 %v803, %v640
          %s920 = scalar_lea.vmem [#allocation2], 16
          %921 = vst [vmem:[%s920] sm:$0xff] %v918
          %922 = vst [vmem:[%s920 + $0x20] sm:$0xff] %v919
          %v923 = vmul.f32 %v802, %v718
          %v924 = vmul.f32 %v803, %v719
          %s925 = scalar_lea.vmem [#allocation2], 24
          %926 = vst [vmem:[%s925] sm:$0xff] %v923
          %927 = vst [vmem:[%s925 + $0x20] sm:$0xff] %v924
        $region92: #{tpu_custom_call.1} parent=35 // pred_fallthru
          _
        // Predicated region
        $region93: #{tpu_custom_call.1} parent=35 // pred_check
          %p928 = pneg %p465
        $region94: #{tpu_custom_call.1} parent=35 // pred_check_branch
          %930 = sbr.rel (%p928) target = $region96
        $region95: #{tpu_custom_call.1} parent=35 // pred_region
          %v931 = vld [vmem:[#allocation3] sm:$0xff]
          %v932 = vld [vmem:[#allocation3 + $0x8] sm:$0xff]
          %v933 = vadd.f32 %v931, %v802
          %v934 = vadd.f32 %v932, %v803
          %935 = vst [vmem:[#allocation3] sm:$0xff] %v933
          %936 = vst [vmem:[#allocation3 + $0x8] sm:$0xff] %v934
          %v937 = vld [vmem:[#allocation2] sm:$0xff]
          %v938 = vld [vmem:[#allocation2 + $0x20] sm:$0xff]
          %v939 = vmul.f32 %v802, %v441
          %v940 = vmul.f32 %v803, %v442
          %v941 = vadd.f32 %v937, %v939
          %v942 = vadd.f32 %v938, %v940
          %943 = vst [vmem:[#allocation2] sm:$0xff] %v941
          %944 = vst [vmem:[#allocation2 + $0x20] sm:$0xff] %v942
          %s945 = scalar_lea.vmem [#allocation2], 8
          %v946 = vld [vmem:[%s945] sm:$0xff]
          %v947 = vld [vmem:[%s945 + $0x20] sm:$0xff]
          %v948 = vmul.f32 %v802, %v518
          %v949 = vmul.f32 %v803, %v519
          %v950 = vadd.f32 %v946, %v948
          %v951 = vadd.f32 %v947, %v949
          %952 = vst [vmem:[%s945] sm:$0xff] %v950
          %953 = vst [vmem:[%s945 + $0x20] sm:$0xff] %v951
          %s954 = scalar_lea.vmem [#allocation2], 16
          %v955 = vld [vmem:[%s954] sm:$0xff]
          %v956 = vld [vmem:[%s954 + $0x20] sm:$0xff]
          %v957 = vmul.f32 %v802, %v639
          %v958 = vmul.f32 %v803, %v640
          %v959 = vadd.f32 %v955, %v957
          %v960 = vadd.f32 %v956, %v958
          %961 = vst [vmem:[%s954] sm:$0xff] %v959
          %962 = vst [vmem:[%s954 + $0x20] sm:$0xff] %v960
          %s963 = scalar_lea.vmem [#allocation2], 24
          %v964 = vld [vmem:[%s963] sm:$0xff]
          %v965 = vld [vmem:[%s963 + $0x20] sm:$0xff]
          %v966 = vmul.f32 %v802, %v718
          %v967 = vmul.f32 %v803, %v719
          %v968 = vadd.f32 %v964, %v966
          %v969 = vadd.f32 %v965, %v967
          %970 = vst [vmem:[%s963] sm:$0xff] %v968
          %971 = vst [vmem:[%s963 + $0x20] sm:$0xff] %v969
        $region96: #{tpu_custom_call.1} parent=35 // pred_fallthru
          _
        %p972 = scmp.eq.s32.totalorder %s34, 1
        // Predicated region
        $region97: #{tpu_custom_call.1} parent=35 // pred_check
          %p973 = pneg %p972
        $region98: #{tpu_custom_call.1} parent=35 // pred_check_branch
          %975 = sbr.rel (%p973) target = $region100
        $region99: #{tpu_custom_call.1} parent=35 // pred_region
          %v976 = vld [vmem:[#allocation3] sm:$0xff]
          %v977 = vld [vmem:[#allocation3 + $0x8] sm:$0xff]
          %v978 = vrcp.pop %v976
          %v979 = vrcp.pop %v977
          %v980 = vld [vmem:[#allocation2] sm:$0xff]
          %v981 = vld [vmem:[#allocation2 + $0x20] sm:$0xff]
          %v982 = vmul.f32 %v980, 0.2
          %v983 = vmul.f32 %v981, 0.2
          %s984 = scalar_lea.vmem [#allocation2], 8
          %v985 = vld [vmem:[%s984] sm:$0xff]
          %v986 = vld [vmem:[%s984 + $0x20] sm:$0xff]
          %v987 = vmul.f32 %v985, 0.25
          %v988 = vmul.f32 %v986, 0.25
          %v989 = vadd.f32 %v982, %v987
          %v990 = vadd.f32 %v983, %v988
          %s991 = scalar_lea.vmem [#allocation2], 16
          %v992 = vld [vmem:[%s991] sm:$0xff]
          %v993 = vld [vmem:[%s991 + $0x20] sm:$0xff]
          %v994 = vmul.f32 %v992, 0.3
          %v995 = vmul.f32 %v993, 0.3
          %v996 = vadd.f32 %v989, %v994
          %v997 = vadd.f32 %v990, %v995
          %s998 = scalar_lea.vmem [#allocation2], 24
          %v999 = vld [vmem:[%s998] sm:$0xff]
          %v1000 = vld [vmem:[%s998 + $0x20] sm:$0xff]
          %v1001 = vmul.f32 %v999, 0.35
          %v1002 = vmul.f32 %v1000, 0.35
          %v1003 = vadd.f32 %v996, %v1001
          %v1004 = vadd.f32 %v997, %v1002
          %v1005 = vmul.f32 %v1003, %v978
          %v1006 = vmul.f32 %v1004, %v979
          %v1007 = vadd.f32 %v1005, 0.05
          %v1008 = vadd.f32 %v1006, 0.05
          %v1009 = vld [vmem:[#allocation4] sm:$0xff]
          %v1010 = vld [vmem:[#allocation4 + $0x40] sm:$0xff]
          %v1011 = vmul.f32 %v1009, 0.33333334
          %v1012 = vmul.f32 %v1010, 0.33333334
          %v1013 = vmul.f32 %v1011, %v1011
          %v1014 = vmul.f32 %v1012, %v1012
          %v1015 = vmul.f32 %v1013, 0.3
          %v1016 = vmul.f32 %v1014, 0.3
          %s1017 = scalar_lea.vmem [#allocation4], 8
          %v1018 = vld [vmem:[%s1017] sm:$0xff]
          %v1019 = vld [vmem:[%s1017 + $0x40] sm:$0xff]
          %v1020 = vmul.f32 %v1018, 0.33333334
          %v1021 = vmul.f32 %v1019, 0.33333334
          %v1022 = vmul.f32 %v1020, %v1020
          %v1023 = vmul.f32 %v1021, %v1021
          %v1024 = vmul.f32 %v1022, 0.35
          %v1025 = vmul.f32 %v1023, 0.35
          %v1026 = vadd.f32 %v1015, %v1024
          %v1027 = vadd.f32 %v1016, %v1025
          %s1028 = scalar_lea.vmem [#allocation4], 16
          %v1029 = vld [vmem:[%s1028] sm:$0xff]
          %v1030 = vld [vmem:[%s1028 + $0x40] sm:$0xff]
          %v1031 = vmul.f32 %v1029, 0.33333334
          %v1032 = vmul.f32 %v1030, 0.33333334
          %v1033 = vmul.f32 %v1031, %v1031
          %v1034 = vmul.f32 %v1032, %v1032
          %v1035 = vmul.f32 %v1033, 0.4
          %v1036 = vmul.f32 %v1034, 0.4
          %v1037 = vadd.f32 %v1026, %v1035
          %v1038 = vadd.f32 %v1027, %v1036
          %s1039 = scalar_lea.vmem [#allocation4], 24
          %v1040 = vld [vmem:[%s1039] sm:$0xff]
          %v1041 = vld [vmem:[%s1039 + $0x40] sm:$0xff]
          %v1042 = vmul.f32 %v1040, 0.33333334
          %v1043 = vmul.f32 %v1041, 0.33333334
          %v1044 = vmul.f32 %v1042, %v1042
          %v1045 = vmul.f32 %v1043, %v1043
          %v1046 = vmul.f32 %v1044, 0.45
          %v1047 = vmul.f32 %v1045, 0.45
          %v1048 = vadd.f32 %v1037, %v1046
          %v1049 = vadd.f32 %v1038, %v1047
          %s1050 = scalar_lea.vmem [#allocation4], 32
          %v1051 = vld [vmem:[%s1050] sm:$0xff]
          %v1052 = vld [vmem:[%s1050 + $0x40] sm:$0xff]
          %v1053 = vmul.f32 %v1051, 0.33333334
          %v1054 = vmul.f32 %v1052, 0.33333334
          %v1055 = vmul.f32 %v1053, %v1053
          %v1056 = vmul.f32 %v1054, %v1054
          %v1057 = vmul.f32 %v1055, 0.5
          %v1058 = vmul.f32 %v1056, 0.5
          %v1059 = vadd.f32 %v1048, %v1057
          %v1060 = vadd.f32 %v1049, %v1058
          %s1061 = scalar_lea.vmem [#allocation4], 40
          %v1062 = vld [vmem:[%s1061] sm:$0xff]
          %v1063 = vld [vmem:[%s1061 + $0x40] sm:$0xff]
          %v1064 = vmul.f32 %v1062, 0.33333334
          %v1065 = vmul.f32 %v1063, 0.33333334
          %v1066 = vmul.f32 %v1064, %v1064
          %v1067 = vmul.f32 %v1065, %v1065
          %v1068 = vmul.f32 %v1066, 0.55
          %v1069 = vmul.f32 %v1067, 0.55
          %v1070 = vadd.f32 %v1059, %v1068
          %v1071 = vadd.f32 %v1060, %v1069
          %s1072 = scalar_lea.vmem [#allocation4], 48
          %v1073 = vld [vmem:[%s1072] sm:$0xff]
          %v1074 = vld [vmem:[%s1072 + $0x40] sm:$0xff]
          %v1075 = vmul.f32 %v1073, 0.33333334
          %v1076 = vmul.f32 %v1074, 0.33333334
          %v1077 = vmul.f32 %v1075, %v1075
          %v1078 = vmul.f32 %v1076, %v1076
          %v1079 = vmul.f32 %v1077, 0.6
          %v1080 = vmul.f32 %v1078, 0.6
          %v1081 = vadd.f32 %v1070, %v1079
          %v1082 = vadd.f32 %v1071, %v1080
          %s1083 = scalar_lea.vmem [#allocation4], 56
          %v1084 = vld [vmem:[%s1083] sm:$0xff]
          %v1085 = vld [vmem:[%s1083 + $0x40] sm:$0xff]
          %v1086 = vmul.f32 %v1084, 0.33333334
          %v1087 = vmul.f32 %v1085, 0.33333334
          %v1088 = vmul.f32 %v1086, %v1086
          %v1089 = vmul.f32 %v1087, %v1087
          %v1090 = vmul.f32 %v1088, 0.65
          %v1091 = vmul.f32 %v1089, 0.65
          %v1092 = vadd.f32 %v1081, %v1090
          %v1093 = vadd.f32 %v1082, %v1091
          %v1094 = vld [vmem:[#allocation5] sm:$0xff]
          %v1095 = vld [vmem:[#allocation5 + $0x8] sm:$0xff]
          %v1096 = vmul.f32 %v1094, 0.33333334
          %v1097 = vmul.f32 %v1095, 0.33333334
          %v1098 = vadd.f32 %v1096, -0.02
          %v1099 = vadd.f32 %v1097, -0.02
          %v1100 = vsub.f32 %v1098, %v1092
          %v1101 = vsub.f32 %v1099, %v1093
          %v1102 = vrot.slane %v1007, 4
          %v1103 = vmax.f32 %v1007, %v1102
          %v1104 = vrot.slane %v1103, 2
          %v1105 = vmax.f32 %v1103, %v1104
          %v1106 = vrot.slane %v1105, 1
          %v1107 = vmax.f32 %v1105, %v1106
          %v1108 = vrot.slane %v1008, 4
          %v1109 = vmax.f32 %v1008, %v1108
          %v1110 = vrot.slane %v1109, 2
          %v1111 = vmax.f32 %v1109, %v1110
          %v1112 = vrot.slane %v1111, 1
          %v1113 = vmax.f32 %v1111, %v1112
          %v1114 = vsub.f32 %v1007, %v1107
          %v1115 = vsub.f32 %v1008, %v1113
          %v1116 = vmul.f32 %v1114, 1.442695
          %v1117 = vpow.pop %v1116
          %v1118 = vmul.f32 %v1115, 1.442695
          %v1119 = vpow.pop %v1118
          %v1120 = vrot.slane %v1117, 4
          %v1121 = vadd.f32 %v1117, %v1120
          %v1122 = vrot.slane %v1121, 2
          %v1123 = vadd.f32 %v1121, %v1122
          %v1124 = vrot.slane %v1123, 1
          %v1125 = vadd.f32 %v1123, %v1124
          %v1126 = vrot.slane %v1119, 4
          %v1127 = vadd.f32 %v1119, %v1126
          %v1128 = vrot.slane %v1127, 2
          %v1129 = vadd.f32 %v1127, %v1128
          %v1130 = vrot.slane %v1129, 1
          %v1131 = vadd.f32 %v1129, %v1130
          %v1132 = vrcp.pop %v1125
          %v1133 = vrcp.pop %v1131
          %v1134 = vmul.f32 %v1117, %v1132
          %v1135 = vmul.f32 %v1119, %v1133
          %v1136 = vrot.slane %v1100, 4
          %v1137 = vmax.f32 %v1100, %v1136
          %v1138 = vrot.slane %v1137, 2
          %v1139 = vmax.f32 %v1137, %v1138
          %v1140 = vrot.slane %v1139, 1
          %v1141 = vmax.f32 %v1139, %v1140
          %v1142 = vrot.slane %v1101, 4
          %v1143 = vmax.f32 %v1101, %v1142
          %v1144 = vrot.slane %v1143, 2
          %v1145 = vmax.f32 %v1143, %v1144
          %v1146 = vrot.slane %v1145, 1
          %v1147 = vmax.f32 %v1145, %v1146
          %v1148 = vsub.f32 %v1100, %v1141
          %v1149 = vsub.f32 %v1101, %v1147
          %v1150 = vmul.f32 %v1148, 1.442695
          %v1151 = vpow.pop %v1150
          %v1152 = vmul.f32 %v1149, 1.442695
          %v1153 = vpow.pop %v1152
          %v1154 = vrot.slane %v1151, 4
          %v1155 = vadd.f32 %v1151, %v1154
          %v1156 = vrot.slane %v1155, 2
          %v1157 = vadd.f32 %v1155, %v1156
          %v1158 = vrot.slane %v1157, 1
          %v1159 = vadd.f32 %v1157, %v1158
          %v1160 = vrot.slane %v1153, 4
          %v1161 = vadd.f32 %v1153, %v1160
          %v1162 = vrot.slane %v1161, 2
          %v1163 = vadd.f32 %v1161, %v1162
          %v1164 = vrot.slane %v1163, 1
          %v1165 = vadd.f32 %v1163, %v1164
          %v1166 = vrcp.pop %v1159
          %v1167 = vrcp.pop %v1165
          %v1168 = vmul.f32 %v1151, %v1166
          %v1169 = vmul.f32 %v1153, %v1167
          %v1170 = vld [vmem:[%s360] sm:$0x3]
          %v1173 = vunpack.c.l.s4 1966171168
          %v1174 = vunpack.c.0.s8 %v1173
          %v1175 = vlaneseq
          %v1176 = vshrl.u32 %v1175, 7
          %v1177 = vsub.s32 %v1174, %v1176
          %v1178 = vrot.slane %v1170, %v1177
          %v1179 = vcombine.high %v1178, %v1178
          %v1181 = vunpack.c.l.s4 1966171168
          %v1182 = vunpack.c.0.s8 %v1181
          %v1183 = vlaneseq
          %v1184 = vshrl.u32 %v1183, 7
          %v1185 = vsub.s32 %v1182, %v1184
          %v1186 = vrot.slane %v1178, %v1185
          %v1188 = vunpack.c.l.s4 1966171168
          %v1189 = vunpack.c.0.s8 %v1188
          %v1190 = vlaneseq
          %v1191 = vshrl.u32 %v1190, 7
          %v1192 = vsub.s32 %v1189, %v1191
          %v1193 = vrot.slane %v1179, %v1192
          %v1196 = vsub.f32 1.0, %v1186
          %v1197 = vsub.f32 1.0, %v1193
          %v1200 = vlaneseq
          %v1201 = vshrl.u32 %v1200, 7
          %v1202 = vsub.s32 0, %v1201
          %v1203 = vrot.slane %v1196, %v1202
          %v1204 = vlaneseq
          %v1205 = vshrl.u32 %v1204, 7
          %v1206 = vsub.s32 0, %v1205
          %v1207 = vrot.slane %v1197, %v1206
          %v1210 = vmul.f32 %v1203, %v1134
          %v1211 = vmul.f32 %v1207, %v1135
          %v1212 = vlaneseq
          %v1213 = vshrl.u32 %v1212, 7
          %v1214 = vsub.s32 0, %v1213
          %v1215 = vrot.slane %v1186, %v1214
          %v1216 = vlaneseq
          %v1217 = vshrl.u32 %v1216, 7
          %v1218 = vsub.s32 0, %v1217
          %v1219 = vrot.slane %v1193, %v1218
          %v1222 = vmul.f32 %v1215, %v1168
          %v1223 = vmul.f32 %v1219, %v1169
          %v1224 = vadd.f32 %v1210, %v1222
          %v1225 = vadd.f32 %v1211, %v1223
          %v1226 = vld [vmem:[%s311] sm:$0xff]
          %v1227 = vld [vmem:[%s311 + $0x8] sm:$0xff]
          %v1228 = vrot.slane %v1224, 4
          %v1229 = vmax.f32 %v1224, %v1228
          %v1230 = vrot.slane %v1229, 2
          %v1231 = vmax.f32 %v1229, %v1230
          %v1232 = vrot.slane %v1231, 1
          %v1233 = vmax.f32 %v1231, %v1232
          %v1234 = vrot.slane %v1225, 4
          %v1235 = vmax.f32 %v1225, %v1234
          %v1236 = vrot.slane %v1235, 2
          %v1237 = vmax.f32 %v1235, %v1236
          %v1238 = vrot.slane %v1237, 1
          %v1239 = vmax.f32 %v1237, %v1238
          %v1240 = vlaneseq
          %v1241 = vshrl.u32 %v1240, 7
          %v1242 = vcvt.s32.f32 %v1241
          %vm1243 = vcmp.eq.f32.partialorder %v1224, %v1233
          %vm1244 = vcmp.eq.f32.partialorder %v1225, %v1239
          %v1245 = vsel %vm1243, %v1242, 8.0
          %v1246 = vsel %vm1244, %v1242, 8.0
          %v1247 = vrot.slane %v1245, 4
          %v1248 = vmin.f32 %v1245, %v1247
          %v1249 = vrot.slane %v1248, 2
          %v1250 = vmin.f32 %v1248, %v1249
          %v1251 = vrot.slane %v1250, 1
          %v1252 = vmin.f32 %v1250, %v1251
          %v1253 = vrot.slane %v1246, 4
          %v1254 = vmin.f32 %v1246, %v1253
          %v1255 = vrot.slane %v1254, 2
          %v1256 = vmin.f32 %v1254, %v1255
          %v1257 = vrot.slane %v1256, 1
          %v1258 = vmin.f32 %v1256, %v1257
          %vm1259 = vcmp.eq.f32.partialorder %v1242, %v1252
          %vm1260 = vcmp.eq.f32.partialorder %v1242, %v1258
          %v1261 = vsel %vm1259, %v1226, 0.0
          %v1262 = vsel %vm1260, %v1227, 0.0
          %v1263 = vrot.slane %v1261, 4
          %v1264 = vadd.f32 %v1261, %v1263
          %v1265 = vrot.slane %v1264, 2
          %v1266 = vadd.f32 %v1264, %v1265
          %v1267 = vrot.slane %v1266, 1
          %v1268 = vadd.f32 %v1266, %v1267
          %v1269 = vrot.slane %v1262, 4
          %v1270 = vadd.f32 %v1262, %v1269
          %v1271 = vrot.slane %v1270, 2
          %v1272 = vadd.f32 %v1270, %v1271
          %v1273 = vrot.slane %v1272, 1
          %v1274 = vadd.f32 %v1272, %v1273
          %v1275 = vrot.slane %v1168, 4
          %v1276 = vmax.f32 %v1168, %v1275
          %v1277 = vrot.slane %v1276, 2
          %v1278 = vmax.f32 %v1276, %v1277
          %v1279 = vrot.slane %v1278, 1
          %v1280 = vmax.f32 %v1278, %v1279
          %v1281 = vrot.slane %v1169, 4
          %v1282 = vmax.f32 %v1169, %v1281
          %v1283 = vrot.slane %v1282, 2
          %v1284 = vmax.f32 %v1282, %v1283
          %v1285 = vrot.slane %v1284, 1
          %v1286 = vmax.f32 %v1284, %v1285
          %v1287 = vrot.slane %v1134, 4
          %v1288 = vmax.f32 %v1134, %v1287
          %v1289 = vrot.slane %v1288, 2
          %v1290 = vmax.f32 %v1288, %v1289
          %v1291 = vrot.slane %v1290, 1
          %v1292 = vmax.f32 %v1290, %v1291
          %v1293 = vrot.slane %v1135, 4
          %v1294 = vmax.f32 %v1135, %v1293
          %v1295 = vrot.slane %v1294, 2
          %v1296 = vmax.f32 %v1294, %v1295
          %v1297 = vrot.slane %v1296, 1
          %v1298 = vmax.f32 %v1296, %v1297
          %v1299 = vrcp.pop %v1226
          %v1300 = vrcp.pop %v1227
          %v1303 = vrot.slane %v1299, 7
          %v1304 = vrot.slane %v1300, 7
          %v1307 = vsub.f32 %v1299, %v1303
          %v1308 = vsub.f32 %v1300, %v1304
          %v1309 = vrcp.pop %v1268
          %v1310 = vrcp.pop %v1274
          %v1311 = vmul.f32 %v1307, 0.5
          %v1312 = vmul.f32 %v1308, 0.5
          %v1313 = vadd.f32 %v1309, %v1311
          %v1314 = vadd.f32 %v1310, %v1312
          %v1315 = vsub.f32 %v1309, %v1311
          %v1316 = vsub.f32 %v1310, %v1312
          %1317 = vst [vmem:[%s349] sm:$0xff] %v1224
          %1318 = vst [vmem:[%s349 + $0x8] sm:$0xff] %v1225
          %vm1321 = vcmask 1041409
          %v1322 = vsel %vm1321, %v1274, %v1268
          %1324 = vst [vmem:[%s356] sm:$0x3] %v1322
          %v1327 = vsel %vm1321, %v1239, %v1233
          %s1329 = scalar_lea.vmem %s356, 2 [#allocation13]
          %1330 = vst [vmem:[%s1329] sm:$0x3] %v1327
          %v1333 = vsel %vm1321, %v1286, %v1280
          %s1335 = scalar_lea.vmem %s356, 4 [#allocation13]
          %1336 = vst [vmem:[%s1335] sm:$0x3] %v1333
          %v1339 = vsel %vm1321, %v1298, %v1292
          %s1341 = scalar_lea.vmem %s356, 6 [#allocation13]
          %1342 = vst [vmem:[%s1341] sm:$0x3] %v1339
          %v1345 = vrot.slane %v1314, 7
          %vm1346 = vcmask 1043459
          %v1347 = vsel %vm1346, %v1345, %v1313
          %s1349 = scalar_lea.vmem %s356, 8 [#allocation13]
          %1350 = vst [vmem:[%s1349 - $0x2] sm:$0xc] %v1347
          %v1353 = vrot.slane %v1316, 7
          %v1354 = vsel %vm1346, %v1353, %v1315
          %s1356 = scalar_lea.vmem %s356, 10 [#allocation13]
          %1357 = vst [vmem:[%s1356 - $0x2] sm:$0xc] %v1354
        $region100: #{tpu_custom_call.1} parent=35 // pred_fallthru
          _
        %s1358 = sand.u32 %s155, 1
        %s1359 = scalar_lea.sflag [#allocation8], %s1358
        %s1360 = sand.u32 %s155, 1
        %s1361 = smul.addr %s1360, 16
        %s1362 = scalar_lea.vmem [#allocation12], %s1361
        %s1363 = sand.u32 %s181, 1
        %s1364 = scalar_lea.sflag [#allocation14], %s1363
        %s1365 = sand.u32 %s181, 1
        %s1366 = smul.addr %s1365, 12
        %s1367 = scalar_lea.vmem [#allocation13], %s1366
        // Predicated region
        $region101: #{tpu_custom_call.1} parent=35 // pred_check
          %p1368 = pneg %p165
        $region102: #{tpu_custom_call.1} parent=35 // pred_check_branch
          %1370 = sbr.rel (%p1368) target = $region104
        $region103: #{tpu_custom_call.1} parent=35 // pred_region
          %s1372 = ssub.s32 256, 256
          %1373 = vsyncadd %s1359, %s1372
          %s1374 = smul.addr %s33, 128
          %s1375 = scalar_lea.hbm %s4, %s1374
          %s1376 = sshll.u32 %s1362, 4
          %s1377 = int_to_ptr.vmem [resolvable:$true] %s1376
          %1382 = dma.vmem_to_hbm [thread:$0]  %s1377, 256, %s1375, %s1359, 128, 256, 8
        $region104: #{tpu_custom_call.1} parent=35 // pred_fallthru
          _
        // Predicated region
        $region105: #{tpu_custom_call.1} parent=35 // pred_check
          %p1383 = pneg %p191
        $region106: #{tpu_custom_call.1} parent=35 // pred_check_branch
          %1385 = sbr.rel (%p1383) target = $region108
        $region107: #{tpu_custom_call.1} parent=35 // pred_region
          %s1387 = ssub.s32 192, 192
          %1388 = vsyncadd %s1364, %s1387
          %s1389 = smul.addr %s33, 32
          %s1390 = scalar_lea.hbm %s5, %s1389
          %s1391 = sshll.u32 %s1367, 4
          %s1392 = int_to_ptr.vmem [resolvable:$true] %s1391
          %1397 = dma.vmem_to_hbm [thread:$0]  %s1392, 192, %s1390, %s1364, 32, 64, 2
        $region108: #{tpu_custom_call.1} parent=35 // pred_fallthru
          _
      $region36: #{tpu_custom_call.1} parent=5 // pred_fallthru
        _
      %p1398 = scmp.le.s32.totalorder 2, %s24
      // Predicated region
      $region109: #{tpu_custom_call.1} parent=5 // pred_check
        %p1399 = pneg %p1398
      $region110: #{tpu_custom_call.1} parent=5 // pred_check_branch
        %1401 = sbr.rel (%p1399) target = $region112
      $region111: #{tpu_custom_call.1} parent=5 // pred_region
        %s1402 = ssub.s32 %s24, 2
        // Predicated region
        $region113: #{tpu_custom_call.1} parent=111 // pred_check
          %p1403 = pneg %p171
        $region114: #{tpu_custom_call.1} parent=111 // pred_check_branch
          %1405 = sbr.rel (%p1403) target = $region116
        $region115: #{tpu_custom_call.1} parent=111 // pred_region
          %s1406 = sand.u32 %s156, 1
          %s1407 = scalar_lea.sflag [#allocation8], %s1406
          %s1408 = sand.u32 %s156, 1
          %s1409 = smul.addr %s1408, 16
          %s1410 = scalar_lea.vmem [#allocation12], %s1409
          %1411 = dma.done %s1407, 256
        $region116: #{tpu_custom_call.1} parent=111 // pred_fallthru
          _
        // Predicated region
        $region117: #{tpu_custom_call.1} parent=111 // pred_check
          %p1412 = pneg %p197
        $region118: #{tpu_custom_call.1} parent=111 // pred_check_branch
          %1414 = sbr.rel (%p1412) target = $region120
        $region119: #{tpu_custom_call.1} parent=111 // pred_region
          %s1415 = sand.u32 %s182, 1
          %s1416 = scalar_lea.sflag [#allocation14], %s1415
          %s1417 = sand.u32 %s182, 1
          %s1418 = smul.addr %s1417, 12
          %s1419 = scalar_lea.vmem [#allocation13], %s1418
          %1420 = dma.done %s1416, 192
        $region120: #{tpu_custom_call.1} parent=111 // pred_fallthru
          _
      $region112: #{tpu_custom_call.1} parent=5 // pred_fallthru
        _
    $region6: #{tpu_custom_call.1} parent=1 // loop_footer
      %s28 = sadd.s32 1, %s24
    $region7: #{tpu_custom_call.1} parent=1 // loop_footer_branch
      %23 = sbr.rel target = $region3
    $region8: #{tpu_custom_call.1} parent=1 // loop_exit
      _
    %1421 = vsyncpa [#allocation7], 1
    %s1422 = scalar_lea.sflag [#allocation7], 1
    %1423 = vsyncpa %s1422, 1
    %1424 = vsyncpa [#allocation10], 1
    %s1425 = scalar_lea.sflag [#allocation10], 1
    %1426 = vsyncpa %s1425, 1
    %1427 = vsyncpa [#allocation8], 1
    %s1428 = scalar_lea.sflag [#allocation8], 1
    %1429 = vsyncpa %s1428, 1
    %1430 = vsyncpa [#allocation14], 1
    %s1431 = scalar_lea.sflag [#allocation14], 1
    %1432 = vsyncpa %s1431, 1

</llo_original>
